<compile_context>
chip_gen: v7x
topology: tpu7x:2x2x1
jax: 0.10.0
libtpu: 0.0.40
codegen_flags: <defaults>
</compile_context>

<pallas_src>
import jax
import jax.numpy as jnp
from jax.experimental import pallas as pl
from jax.experimental.pallas import tpu as pltpu

LANES = 128

# Up to 256 (sub,128) groups per block: f32 -> 1 MiB per input per block.
REDUCE_BLOCK_GROUPS_MAX = 256
VMEM_LIMIT_BYTES = 32 * 1024 * 1024     # explicit scoped-VMEM limit (v5e default is 16 MiB)

# Below these element counts a pallas_call launch is pure overhead - let XLA fuse it.
MSE_PALLAS_MIN_ELEMS = 16 * 1024
CONSTRAINT_PALLAS_MIN_ELEMS = 64 * 1024


def _sublanes_for(dtype):
    """Native (sub,128) tile height: 8 for 4-byte, 16 for 2-byte, 32 for 1-byte dtypes."""
    return {4: 8, 2: 16, 1: 32}.get(jnp.dtype(dtype).itemsize, 8)


def _num_tensorcores():
    """Best-effort TensorCore count per device. Core-split the grid only where it helps
    (v7x / megacore); on single-TC v5e/v6e a split is just a serial loop with overhead."""
    try:
        kind = jax.devices()[0].device_kind.lower().replace(" ", "").replace("-", "")
    except Exception:
        return 1
    if any(t in kind for t in ("v4lite", "v5lite", "v5e", "v6lite", "v6e")):
        return 1
    if any(t in kind for t in ("v4", "v5p", "v7", "tpu7")):
        return 2
    return 1


# ------------------------- generic streaming lane-dense reduction ------------------------- #

def _make_reduce_kernel(n_in, term_fns, block_groups, sub, n_groups_valid, full_blocks):
    """Kernel computing, for each term_fn, sum(term_fn(*f32_inputs)) into a lane-dense
    (sub,128) f32 accumulator; one partial output slab per grid row (core)."""
    n_terms = len(term_fns)

    def kernel(*refs):
        in_refs = refs[:n_in]
        out_refs = refs[n_in:n_in + n_terms]
        acc_refs = refs[n_in + n_terms:]

        i = pl.program_id(1)
        # Logical (unclamped) block id; used to gate the tail mask and to mask the
        # re-read overshoot blocks of the core split.
        lb = pl.program_id(0) * pl.num_programs(1) + i

        @pl.when(i == 0)
        def _():
            for a in acc_refs:
                a[...] = jnp.zeros_like(a)

        # Native-dtype blocks cast to f32 in-register (no separate XLA convert pass).
        xs = [r[...].astype(jnp.float32) for r in in_refs]
        terms = [fn(*xs) for fn in term_fns]

        # Fast path: block fully inside the valid group range -> pure VPU accumulate.
        @pl.when(lb < full_blocks)
        def _():
            for a, t in zip(acc_refs, terms):
                a[...] += jnp.sum(t, axis=0)

        # Slow path: ragged last block / core-split overshoot -> mask invalid groups.
        # (Load-bearing: the last block's window extends past the slab, OOB data is
        #  undefined; overshoot blocks re-read a valid block and must contribute zero.)
        @pl.when(lb >= full_blocks)
        def _():
            gid = lb * block_groups + jax.lax.broadcasted_iota(
                jnp.int32, (block_groups, sub, LANES), 0)
            valid = gid < n_groups_valid
            for a, t in zip(acc_refs, terms):
                a[...] += jnp.sum(jnp.where(valid, t, 0.0), axis=0)

        @pl.when(i == pl.num_programs(1) - 1)
        def _():
            for o, a in zip(out_refs, acc_refs):
                o[...] = a[...]

    return kernel


def _streaming_reduce_sums(arrays, term_fns):
    """One streaming HBM pass computing [sum(fn(*arrays_as_f32)) for fn in term_fns].
    Arrays must share the element count and dtype itemsize. No padding / concatenation:
    whole (sub,128) groups go through Pallas, the ragged remainder is added with jnp."""
    n = int(arrays[0].size)
    sub = _sublanes_for(arrays[0].dtype)
    gsz = sub * LANES
    flats = [jnp.ravel(a) for a in arrays]
    n_groups = n // gsz
    n_main = n_groups * gsz

    if n_groups == 0:   # less than one group of data: XLA fallback
        fs = [f.astype(jnp.float32) for f in flats]
        return [jnp.sum(fn(*fs)) for fn in term_fns]

    # Whole-group prefix only (contiguous prefix reshape, no pad copy of the inputs).
    slabs = [f[:n_main].reshape(n_groups, sub, LANES) for f in flats]

    block_groups = min(REDUCE_BLOCK_GROUPS_MAX, n_groups)
    nb_total = int(pl.cdiv(n_groups, block_groups))
    full_blocks = n_groups // block_groups          # blocks with no invalid groups
    n_cores = _num_tensorcores() if nb_total >= 2 else 1
    nb_per_core = int(pl.cdiv(nb_total, n_cores))

    if n_cores == 1:
        in_map = lambda c, i: (i, 0, 0)
    else:
        # Overshoot blocks of the core split re-read a valid block; masked to 0 in-kernel.
        in_map = lambda c, i: (jnp.minimum(c * nb_per_core + i, nb_total - 1), 0, 0)

    in_spec = pl.BlockSpec((block_groups, sub, LANES), in_map)
    out_spec = pl.BlockSpec((None, sub, LANES), lambda c, i: (c, 0, 0))
    one_out = jax.ShapeDtypeStruct((n_cores, sub, LANES), jnp.float32)
    if len(term_fns) == 1:
        out_shape_arg, out_specs_arg = one_out, out_spec
    else:
        out_shape_arg = tuple(one_out for _ in term_fns)
        out_specs_arg = tuple(out_spec for _ in term_fns)

    result = pl.pallas_call(
        _make_reduce_kernel(len(arrays), term_fns, block_groups, sub,
                            n_groups, full_blocks),
        out_shape=out_shape_arg,
        grid_spec=pltpu.PrefetchScalarGridSpec(
            num_scalar_prefetch=0,
            grid=(n_cores, nb_per_core),
            in_specs=[in_spec] * len(arrays),
            out_specs=out_specs_arg,
            scratch_shapes=[pltpu.VMEM((sub, LANES), jnp.float32)] * len(term_fns),
        ),
        compiler_params=pltpu.CompilerParams(
            dimension_semantics=("parallel", "arbitrary"),
            vmem_limit_bytes=VMEM_LIMIT_BYTES),
    )(*slabs)
    outs = result if isinstance(result, (tuple, list)) else (result,)

    # Tiny final cross-lane reduce of the lane-dense partials is done by XLA.
    sums = [jnp.sum(o) for o in outs]

    if n_main != n:   # <1-group ragged remainder via plain jnp (no pad copy)
        tails = [f[n_main:].astype(jnp.float32) for f in flats]
        sums = [s + jnp.sum(fn(*tails)) for s, fn in zip(sums, term_fns)]
    return sums


# ------------------------- loss-term reductions ------------------------- #

def _sq_err_sum(y_pred, y_gt):
    """sum((y_pred - y_gt)**2) in f32."""
    if y_gt.dtype != y_pred.dtype:       # rare; keeps a single native streaming dtype
        y_gt = y_gt.astype(y_pred.dtype)
    if int(y_pred.size) < MSE_PALLAS_MIN_ELEMS:
        d = jnp.ravel(y_pred).astype(jnp.float32) - jnp.ravel(y_gt).astype(jnp.float32)
        return jnp.sum(d * d)
    (ss,) = _streaming_reduce_sums([y_pred, y_gt], [lambda p, g: (p - g) * (p - g)])
    return ss


def _constraint_ss_l1(c, lam):
    """Per-parameter (sum(c^2), sum(|lam*c|) or None). Tiny params (biases/norms) and
    mixed-itemsize pairs go through plain XLA; large params get one streaming kernel."""
    small = int(c.size) < CONSTRAINT_PALLAS_MIN_ELEMS
    mixed = lam is not None and jnp.dtype(lam.dtype).itemsize != jnp.dtype(c.dtype).itemsize
    if small or mixed:
        cf = jnp.ravel(c).astype(jnp.float32)
        ss = jnp.sum(cf * cf)
        if lam is None:
            return ss, None
        lf = jnp.ravel(lam).astype(jnp.float32)
        return ss, jnp.sum(jnp.abs(lf * cf))
    if lam is None:   # default zero multipliers: no lambda DMA, no L1 work
        (ss,) = _streaming_reduce_sums([c], [lambda x: x * x])
        return ss, None
    ss, l1 = _streaming_reduce_sums(
        [c, lam], [lambda x, l: x * x, lambda x, l: jnp.abs(l * x)])
    return ss, l1


# ------------------------- Module-equivalent wrapper ------------------------- #

class AugmentedLagrangianLossPallas:
    """JAX/Pallas port of Augmented_Lagrangian_Loss.forward (state updates host-side)."""

    def __init__(self, model_params, lag_multipliers=None,
                 init_penalty=1.0, penalty_update_factor=1.1, max_penalty=10.0):
        self.data_fid_weight = 1.5
        self.model_params = dict(model_params)
        self._param_order = list(self.model_params.keys())
        if lag_multipliers is None:
            self.lag_multipliers = {k: jnp.zeros_like(v) for k, v in self.model_params.items()}
            self._lam_all_zero = True      # default init -> skip L1 term & its HBM traffic
        else:
            self.lag_multipliers = dict(lag_multipliers)
            self._lam_all_zero = False
        self.penalty_factor = float(init_penalty)
        self.penalty_update_factor = float(penalty_update_factor)
        self.max_penalty = float(max_penalty)

    # Identity constraint: c(theta) = theta.
    # TODO(synk): replace with the real Constraint._constraint_on_params composition.
    def constraint_on_params(self):
        return {k: self.model_params[k] for k in self._param_order}

    def increase_penalty(self):
        self.penalty_factor = min(self.penalty_factor * self.penalty_update_factor,
                                  self.max_penalty)

    def get_penalty(self):
        return self.penalty_factor

    def __call__(self, y_pred, y_gt):
        # objective_function := MSE (mean reduction) via the Pallas streaming reduction.
        mse = _sq_err_sum(y_pred, y_gt) / jnp.float32(y_pred.size)
        total = self.data_fid_weight * mse

        cons = self.constraint_on_params()
        aug = jnp.float32(0.0)
        l1_total = jnp.float32(0.0)
        for k in self._param_order:
            c = cons[k]
            lam = None if self._lam_all_zero else self.lag_multipliers[k]
            ss, l1_p = _constraint_ss_l1(c, lam)
            aug = aug + jnp.sqrt(ss)                # ||c_p||_2
            if l1_p is not None:
                l1_total = l1_total + l1_p          # ||lambda_p * c_p||_1

        total = total + (self.penalty_factor / 2.0) * aug
        if not self._lam_all_zero:
            total = total + l1_total
        return total


# ------------------------- demo / self-check ------------------------- #

if __name__ == "__main__":
    key = jax.random.PRNGKey(0)
    ks = jax.random.split(key, 16)

    # NCHW activations (PyTorch convention) - small shapes.
    y_pred = jax.random.normal(ks[0], (2, 4, 16, 16), dtype=jnp.float32)
    y_gt = jax.random.normal(ks[1], (2, 4, 16, 16), dtype=jnp.float32)

    # Synthetic model parameters (identity constraint applies to these).
    params = {
        "conv.weight": jax.random.normal(ks[2], (8, 4, 3, 3), dtype=jnp.float32) * 0.1,
        "conv.bias": jax.random.normal(ks[3], (8,), dtype=jnp.float32) * 0.1,
        "fc.weight": jax.random.normal(ks[4], (32, 64), dtype=jnp.float32) * 0.1,
    }
    lag = {
        "conv.weight": jax.random.normal(ks[5], (8, 4, 3, 3), dtype=jnp.float32) * 0.05,
        "conv.bias": jax.random.normal(ks[6], (8,), dtype=jnp.float32) * 0.05,
        "fc.weight": jax.random.normal(ks[7], (32, 64), dtype=jnp.float32) * 0.05,
    }

    def reference_loss(yp, yg, ps, penalty, lag_or_none):
        ref = 1.5 * jnp.mean((yp.astype(jnp.float32) - yg.astype(jnp.float32)) ** 2)
        for k, p in ps.items():
            pf = p.astype(jnp.float32)
            ref = ref + 0.5 * penalty * jnp.sqrt(jnp.sum(pf ** 2))
            if lag_or_none is not None:
                ref = ref + jnp.sum(jnp.abs(lag_or_none[k].astype(jnp.float32) * pf))
        return ref

    # 1) Small activations + tiny params, non-zero multipliers -> XLA fallback paths.
    m1 = AugmentedLagrangianLossPallas(params, lag, init_penalty=1.0)
    l1v = jax.block_until_ready(m1(y_pred, y_gt))
    r1 = reference_loss(y_pred, y_gt, params, 1.0, lag)
    assert jnp.allclose(l1v, r1, rtol=1e-5, atol=1e-4), (l1v, r1)

    # 2) Default zero multipliers -> L1 term skipped.
    m2 = AugmentedLagrangianLossPallas(params, None, init_penalty=1.0)
    l2v = jax.block_until_ready(m2(y_pred, y_gt))
    r2 = reference_loss(y_pred, y_gt, params, 1.0, None)
    assert jnp.allclose(l2v, r2, rtol=1e-5, atol=1e-4), (l2v, r2)

    # 3) Large ragged activation: Pallas MSE kernel with multi-block accumulation,
    #    gated tail mask, jnp remainder, and (on multi-TC chips) the core split.
    a = jax.random.normal(ks[8], (3, 5, 97, 181), dtype=jnp.float32)
    b = jax.random.normal(ks[9], (3, 5, 97, 181), dtype=jnp.float32)
    got = jax.block_until_ready(_sq_err_sum(a, b))
    want = jnp.sum((a - b) ** 2)
    assert jnp.allclose(got, want, rtol=1e-4, atol=1e-2), (got, want)

    # 4) Large param + larger activation: full module path through the Pallas streaming
    #    kernels (ss+l1 two-output variant, then the ss-only zero-lambda variant).
    yp_big = jax.random.normal(ks[10], (2, 4, 64, 64), dtype=jnp.float32)
    yg_big = jax.random.normal(ks[11], (2, 4, 64, 64), dtype=jnp.float32)
    big_params = dict(params)
    big_params["enc.weight"] = jax.random.normal(ks[12], (768, 641), dtype=jnp.float32) * 0.1
    big_lag = dict(lag)
    big_lag["enc.weight"] = jax.random.normal(ks[13], (768, 641), dtype=jnp.float32) * 0.05

    m3 = AugmentedLagrangianLossPallas(big_params, big_lag, init_penalty=2.0)
    l3v = jax.block_until_ready(m3(yp_big, yg_big))
    r3 = reference_loss(yp_big, yg_big, big_params, 2.0, big_lag)
    assert jnp.allclose(l3v, r3, rtol=5e-4, atol=1e-2), (l3v, r3)

    m4 = AugmentedLagrangianLossPallas(big_params, None, init_penalty=2.0)
    l4v = jax.block_until_ready(m4(yp_big, yg_big))
    r4 = reference_loss(yp_big, yg_big, big_params, 2.0, None)
    assert jnp.allclose(l4v, r4, rtol=5e-4, atol=1e-2), (l4v, r4)

    print("KERNEL_OK")
</pallas_src>

<mosaic_0001>
module attributes {stable_mosaic.version = 11 : i64} {
  func.func @kernel(%arg0: i32, %arg1: i32, %arg2: memref<256x8x128xf32, #tpu.memory_space<vmem>>, %arg3: memref<256x8x128xf32, #tpu.memory_space<vmem>>, %arg4: memref<1x8x128xf32, #tpu.memory_space<vmem>>, %arg5: memref<8x128xf32, #tpu.memory_space<vmem>>) attributes {dimension_semantics = [#tpu.dimension_semantics<parallel>, #tpu.dimension_semantics<arbitrary>], iteration_bounds = array<i64: 1, 2>, scalar_prefetch = 0 : i64, scratch_operands = 1 : i64, tpu.core_type = #tpu.core_type<tc>, window_params = [{transform_indices = @transform_0, window_bounds = array<i64: 256, 8, 128>}, {transform_indices = @transform_1, window_bounds = array<i64: 256, 8, 128>}, {transform_indices = @transform_2, window_bounds = array<i64: 1, 8, 128>}]} {
    %c2_i32 = arith.constant 2 : i32
    %0 = arith.muli %arg0, %c2_i32 : i32
    %1 = arith.addi %0, %arg1 : i32
    %c0_i32 = arith.constant 0 : i32
    %2 = arith.cmpi eq, %arg1, %c0_i32 : i32
    %3 = arith.extui %2 : i1 to i32
    %c0_i32_0 = arith.constant 0 : i32
    %4 = arith.cmpi ne, %3, %c0_i32_0 : i32
    scf.if %4 {
      %cst = arith.constant 0.000000e+00 : f32
      %19 = vector.broadcast %cst : f32 to vector<8x128xf32>
      %c0_11 = arith.constant 0 : index
      %c0_12 = arith.constant 0 : index
      %20 = vector.load %arg5[%c0_11, %c0_12] : memref<8x128xf32, #tpu.memory_space<vmem>>, vector<8x128xf32>
      tpu.vector_store %arg5[%c0_11, %c0_12], %19 {strides = array<i32>} : memref<8x128xf32, #tpu.memory_space<vmem>>, vector<8x128xf32>,
    } else {
    }
    %c0 = arith.constant 0 : index
    %c0_1 = arith.constant 0 : index
    %c0_2 = arith.constant 0 : index
    %5 = vector.load %arg2[%c0, %c0_1, %c0_2] : memref<256x8x128xf32, #tpu.memory_space<vmem>>, vector<256x8x128xf32>
    %c0_3 = arith.constant 0 : index
    %c0_4 = arith.constant 0 : index
    %c0_5 = arith.constant 0 : index
    %6 = vector.load %arg3[%c0_3, %c0_4, %c0_5] : memref<256x8x128xf32, #tpu.memory_space<vmem>>, vector<256x8x128xf32>
    %7 = arith.subf %5, %6 : vector<256x8x128xf32>
    %8 = arith.subf %5, %6 : vector<256x8x128xf32>
    %9 = arith.mulf %7, %8 : vector<256x8x128xf32>
    %c1_i32 = arith.constant 1 : i32
    %10 = arith.cmpi slt, %1, %c1_i32 : i32
    %11 = arith.extui %10 : i1 to i32
    %c0_i32_6 = arith.constant 0 : i32
    %12 = arith.cmpi ne, %11, %c0_i32_6 : i32
    scf.if %12 {
      %c0_11 = arith.constant 0 : index
      %c0_12 = arith.constant 0 : index
      %19 = vector.load %arg5[%c0_11, %c0_12] : memref<8x128xf32, #tpu.memory_space<vmem>>, vector<8x128xf32>
      %cst = arith.constant dense<0.000000e+00> : vector<8x128xf32>
      %20 = vector.multi_reduction <add>, %9, %cst [0] : vector<256x8x128xf32> to vector<8x128xf32>
      %21 = arith.addf %19, %20 : vector<8x128xf32>
      %c0_13 = arith.constant 0 : index
      %c0_14 = arith.constant 0 : index
      %22 = vector.load %arg5[%c0_13, %c0_14] : memref<8x128xf32, #tpu.memory_space<vmem>>, vector<8x128xf32>
      tpu.vector_store %arg5[%c0_13, %c0_14], %21 {strides = array<i32>} : memref<8x128xf32, #tpu.memory_space<vmem>>, vector<8x128xf32>,
    } else {
    }
    %c1_i32_7 = arith.constant 1 : i32
    %13 = arith.cmpi sge, %1, %c1_i32_7 : i32
    %14 = arith.extui %13 : i1 to i32
    %c0_i32_8 = arith.constant 0 : i32
    %15 = arith.cmpi ne, %14, %c0_i32_8 : i32
    scf.if %15 {
      %c256_i32 = arith.constant 256 : i32
      %19 = arith.muli %1, %c256_i32 : i32
      %20 = tpu.iota {dimensions = array<i32: 0>} : vector<256x8x128xi32>
      %21 = vector.broadcast %19 : i32 to vector<256x8x128xi32>
      %22 = arith.addi %21, %20 : vector<256x8x128xi32>
      %c257_i32 = arith.constant 257 : i32
      %23 = vector.broadcast %c257_i32 : i32 to vector<256x8x128xi32>
      %24 = arith.cmpi slt, %22, %23 : vector<256x8x128xi32>
      %c0_11 = arith.constant 0 : index
      %c0_12 = arith.constant 0 : index
      %25 = vector.load %arg5[%c0_11, %c0_12] : memref<8x128xf32, #tpu.memory_space<vmem>>, vector<8x128xf32>
      %cst = arith.constant 0.000000e+00 : f32
      %26 = vector.broadcast %cst : f32 to vector<256x8x128xf32>
      %27 = arith.select %24, %9, %26 : vector<256x8x128xi1>, vector<256x8x128xf32>
      %cst_13 = arith.constant dense<0.000000e+00> : vector<8x128xf32>
      %28 = vector.multi_reduction <add>, %27, %cst_13 [0] : vector<256x8x128xf32> to vector<8x128xf32>
      %29 = arith.addf %25, %28 : vector<8x128xf32>
      %c0_14 = arith.constant 0 : index
      %c0_15 = arith.constant 0 : index
      %30 = vector.load %arg5[%c0_14, %c0_15] : memref<8x128xf32, #tpu.memory_space<vmem>>, vector<8x128xf32>
      tpu.vector_store %arg5[%c0_14, %c0_15], %29 {strides = array<i32>} : memref<8x128xf32, #tpu.memory_space<vmem>>, vector<8x128xf32>,
    } else {
    }
    %c1_i32_9 = arith.constant 1 : i32
    %16 = arith.cmpi eq, %arg1, %c1_i32_9 : i32
    %17 = arith.extui %16 : i1 to i32
    %c0_i32_10 = arith.constant 0 : i32
    %18 = arith.cmpi ne, %17, %c0_i32_10 : i32
    scf.if %18 {
      %c0_11 = arith.constant 0 : index
      %c0_12 = arith.constant 0 : index
      %19 = vector.load %arg5[%c0_11, %c0_12] : memref<8x128xf32, #tpu.memory_space<vmem>>, vector<8x128xf32>
      %c0_13 = arith.constant 0 : index
      %c0_14 = arith.constant 0 : index
      %c0_15 = arith.constant 0 : index
      %20 = vector.load %arg4[%c0_13, %c0_14, %c0_15] : memref<1x8x128xf32, #tpu.memory_space<vmem>>, vector<1x8x128xf32>
      %21 = vector.shape_cast %20 : vector<1x8x128xf32> to vector<8x128xf32>
      %22 = vector.shape_cast %19 : vector<8x128xf32> to vector<1x8x128xf32>
      tpu.vector_store %arg4[%c0_13, %c0_14, %c0_15], %22 {strides = array<i32>} : memref<1x8x128xf32, #tpu.memory_space<vmem>>, vector<1x8x128xf32>,
    } else {
    }
    return
  }
  func.func @transform_0(%arg0: i32, %arg1: i32) -> (i32, i32, i32) {
    %c0_i32 = arith.constant 0 : i32
    %c0_i32_0 = arith.constant 0 : i32
    %c0_i32_1 = arith.constant 0 : i32
    return %arg1, %c0_i32, %c0_i32_0 : i32, i32, i32
  }
  func.func @transform_1(%arg0: i32, %arg1: i32) -> (i32, i32, i32) {
    %c0_i32 = arith.constant 0 : i32
    %c0_i32_0 = arith.constant 0 : i32
    %c0_i32_1 = arith.constant 0 : i32
    return %arg1, %c0_i32, %c0_i32_0 : i32, i32, i32
  }
  func.func @transform_2(%arg0: i32, %arg1: i32) -> (i32, i32, i32) {
    %c0_i32 = arith.constant 0 : i32
    %c0_i32_0 = arith.constant 0 : i32
    %c0_i32_1 = arith.constant 0 : i32
    return %arg0, %c0_i32, %c0_i32_0 : i32, i32, i32
  }
}

</mosaic_0001>

<llo_original>
// kernel: tpu_custom_call.1
$region0: #{tpu_custom_call.1}
  #allocation0 [shape = 'u32[]', space=smem, size = 0x4, offset = 0x4, fixed_abs, tag = 'smem constant byte address 0x4 - core index']
  #allocation1 [shape = 'u32[144,128]{1,0:T(1,128)}', space=vmem, size = 0x12000, scoped, tag = 'internal scratch']
  #allocation2 [shape = 'f32[8,128]{1,0:T(8,128)}', space=vmem, size = 0x1000, scoped, tag = 'scratch operand']
  %s0 = inlined_call_operand.hbm [shape: f32[257,8,128], index: 0, kind: input, shape index: {}]
  %s1 = inlined_call_operand.hbm [shape: f32[257,8,128], index: 1, kind: input, shape index: {}]
  %s2 = inlined_call_operand.hbm [shape: f32[1,8,128], index: 2, kind: output, shape index: {}]
  %s3 = sld [smem:[#allocation0]]
  $region65: #{tpu_custom_call.1} parent=0
    _
  %s5 = ssub.s32 1, %s3
  %s6 = scalar_select 0, %s5, %s3
  $region1: #{tpu_custom_call.1} parent=0
    #allocation3 [shape = 'u8[2097152]{0}', space=vmem, size = 0x200000, scoped, tag = 'input window, operand 0']
    #allocation4 [shape = 's32[2]{0}', space=sflag, size = 0x8, scoped, tag = 'scoped memory for tpu_custom_call.1']
    #allocation5 [shape = 's32[2]{0}', space=sflag, size = 0x8, scoped, tag = 'scoped memory for tpu_custom_call.1']
    #allocation6 [shape = 'u8[2097152]{0}', space=vmem, size = 0x200000, scoped, tag = 'input window, operand 1']
    #allocation7 [shape = 's32[2]{0}', space=sflag, size = 0x8, scoped, tag = 'scoped memory for tpu_custom_call.1']
    #allocation8 [shape = 'u8[4096]{0}', space=vmem, size = 0x1000, scoped, tag = 'output window, operand 0, single buffered']
    %7 = vsyncpa [#allocation4], 0
    %s8 = scalar_lea.sflag [#allocation4], 1
    %9 = vsyncpa %s8, 0
    %10 = vsyncpa [#allocation7], 0
    %s11 = scalar_lea.sflag [#allocation7], 1
    %12 = vsyncpa %s11, 0
    %13 = vsyncpa [#allocation5], 0
    loop: start=0, step=1, limit=4
    $region2: #{tpu_custom_call.1} parent=1 // loop_pre_header
      _
    $region3: #{tpu_custom_call.1} parent=1 // loop_header
      %s15 = sphi 0, %s19
      %p16 = scmp.ge.s32.totalorder %s15, 4
      %s22 = sphi 0, %s34
      %s23 = sphi 0, %s30
      %s24 = sphi 0, %s22
      %s25 = sphi 0, %s23
      %s26 = sphi 0, %s24
      %s27 = sphi 0, %s25
      %s37 = sphi 0, %s39
      %s40 = sphi 0, %s37
      %s41 = sphi 0, %s40
      %s57 = sphi 0, %s41
      %s63 = sphi 0, %s65
      %s66 = sphi 0, %s63
      %s67 = sphi 0, %s66
      %s83 = sphi 0, %s67
      %s89 = sphi 0, %s91
      %s92 = sphi 0, %s89
      %s93 = sphi 0, %s92
      %s109 = sphi 0, %s93
    $region4: #{tpu_custom_call.1} parent=1 // loop_header_branch
      %18 = sbr.rel (%p16) target = $region8
    $region5: #{tpu_custom_call.1} parent=1 // loop_body
      %s20 = ssub.s32 %s15, 1
      %s21 = ssub.s32 %s15, 2
      %s28 = sadd.s32 1, %s23
      %p29 = scmp.ge.s32.totalorder %s28, 2
      %s30 = scalar_select %p29, 0, %s28
      %s31 = sadd.s32 1, %s22
      %s32 = scalar_select %p29, %s31, %s22
      %p33 = scmp.ge.s32.totalorder %s32, 1
      %s34 = scalar_select %p33, 0, %s32
      %s35 = ssub.s32 %s23, %s30
      %p36 = scmp.eq.s32.totalorder %s35, 0
      %s38 = sadd.s32 %s37, 1
      %s39 = scalar_select %p36, %s37, %s38
      %p42 = pneg %p36
      %p43 = scmp.eq.s32.totalorder %s15, 1
      %p44 = por %p42, %p43
      %p45 = scmp.ne.s32.totalorder %s37, %s40
      %p46 = scmp.eq.s32.totalorder %s15, 0
      %p47 = por %p45, %p46
      %p48 = scmp.ne.s32.totalorder %s37, %s40
      %p49 = scmp.eq.s32.totalorder %s20, 1
      %p50 = por %p48, %p49
      %p51 = scmp.ne.s32.totalorder %s40, %s41
      %p52 = scmp.eq.s32.totalorder %s20, 0
      %p53 = por %p51, %p52
      %p54 = scmp.ne.s32.totalorder %s40, %s41
      %p55 = scmp.eq.s32.totalorder %s21, 1
      %p56 = por %p54, %p55
      %p58 = scmp.ne.s32.totalorder %s41, %s57
      %p59 = scmp.eq.s32.totalorder %s21, 0
      %p60 = por %p58, %p59
      %s61 = ssub.s32 %s23, %s30
      %p62 = scmp.eq.s32.totalorder %s61, 0
      %s64 = sadd.s32 %s63, 1
      %s65 = scalar_select %p62, %s63, %s64
      %p68 = pneg %p62
      %p69 = scmp.eq.s32.totalorder %s15, 1
      %p70 = por %p68, %p69
      %p71 = scmp.ne.s32.totalorder %s63, %s66
      %p72 = scmp.eq.s32.totalorder %s15, 0
      %p73 = por %p71, %p72
      %p74 = scmp.ne.s32.totalorder %s63, %s66
      %p75 = scmp.eq.s32.totalorder %s20, 1
      %p76 = por %p74, %p75
      %p77 = scmp.ne.s32.totalorder %s66, %s67
      %p78 = scmp.eq.s32.totalorder %s20, 0
      %p79 = por %p77, %p78
      %p80 = scmp.ne.s32.totalorder %s66, %s67
      %p81 = scmp.eq.s32.totalorder %s21, 1
      %p82 = por %p80, %p81
      %p84 = scmp.ne.s32.totalorder %s67, %s83
      %p85 = scmp.eq.s32.totalorder %s21, 0
      %p86 = por %p84, %p85
      %s87 = ssub.s32 %s22, %s34
      %p88 = scmp.eq.s32.totalorder %s87, 0
      %s90 = sadd.s32 %s89, 1
      %s91 = scalar_select %p88, %s89, %s90
      %p94 = pneg %p88
      %p95 = scmp.eq.s32.totalorder %s15, 1
      %p96 = por %p94, %p95
      %p97 = scmp.ne.s32.totalorder %s89, %s92
      %p98 = scmp.eq.s32.totalorder %s15, 0
      %p99 = por %p97, %p98
      %p100 = scmp.ne.s32.totalorder %s89, %s92
      %p101 = scmp.eq.s32.totalorder %s20, 1
      %p102 = por %p100, %p101
      %p103 = scmp.ne.s32.totalorder %s92, %s93
      %p104 = scmp.eq.s32.totalorder %s20, 0
      %p105 = por %p103, %p104
      %p106 = scmp.ne.s32.totalorder %s92, %s93
      %p107 = scmp.eq.s32.totalorder %s21, 1
      %p108 = por %p106, %p107
      %p110 = scmp.ne.s32.totalorder %s93, %s109
      %p111 = scmp.eq.s32.totalorder %s21, 0
      %p112 = por %p110, %p111
      %p113 = scmp.le.s32.totalorder 1, %s15
      %p114 = scmp.lt.s32.totalorder %s15, 3
      %p115 = pnand %p113, %p114
      %p116 = pneg %p115
      // Predicated region
      $region9: #{tpu_custom_call.1} parent=5 // pred_check
        _
      $region10: #{tpu_custom_call.1} parent=5 // pred_check_branch
        %118 = sbr.rel (%p115) target = $region12
      $region11: #{tpu_custom_call.1} parent=5 // pred_region
        %s119 = ssub.s32 %s15, 1
      $region12: #{tpu_custom_call.1} parent=5 // pred_fallthru
        _
      %p120 = scmp.lt.s32.totalorder %s15, 2
      // Predicated region
      $region13: #{tpu_custom_call.1} parent=5 // pred_check
        %p121 = pneg %p120
      $region14: #{tpu_custom_call.1} parent=5 // pred_check_branch
        %123 = sbr.rel (%p121) target = $region16
      $region15: #{tpu_custom_call.1} parent=5 // pred_region
        // Predicated region
        $region17: #{tpu_custom_call.1} parent=15 // pred_check
          %p124 = pneg %p47
        $region18: #{tpu_custom_call.1} parent=15 // pred_check_branch
          %126 = sbr.rel (%p124) target = $region20
        $region19: #{tpu_custom_call.1} parent=15 // pred_region
          %s127 = sand.u32 %s37, 1
          %s128 = scalar_lea.sflag [#allocation4], %s127
          %s129 = sand.u32 %s37, 1
          %s130 = smul.addr %s129, 2048
          %s131 = scalar_lea.vmem [#allocation3], %s130
          %s132 = smul.u32 256, %s23
          %s133 = ssub.s32 257, %s132
          %p134 = scmp.lt.s32.totalorder %s133, 256
          %s135 = scalar_select %p134, %s133, 256
          %s136 = smul.u32 128, %s135
          %s138 = ssub.s32 32768, %s136
          %139 = vsyncadd %s128, %s138
          %p140 = scmp.ne.s32.totalorder 0, %s136
          %s141 = smul.addr %s132, 128
          %s142 = scalar_lea.hbm %s0, %s141
          %s143 = smul.u32 8, %s135
          %s144 = sshll.u32 %s131, 4
          %s145 = int_to_ptr.vmem [resolvable:$true] %s144
          %s146 = sshll.u32 %s143, 4
          %150 = dma.hbm_to_vmem [thread:$0]  (%p140), %s142, %s146, %s145, %s128, 128, 128, 8
        $region20: #{tpu_custom_call.1} parent=15 // pred_fallthru
          _
        // Predicated region
        $region21: #{tpu_custom_call.1} parent=15 // pred_check
          %p151 = pneg %p73
        $region22: #{tpu_custom_call.1} parent=15 // pred_check_branch
          %153 = sbr.rel (%p151) target = $region24
        $region23: #{tpu_custom_call.1} parent=15 // pred_region
          %s154 = sand.u32 %s63, 1
          %s155 = scalar_lea.sflag [#allocation7], %s154
          %s156 = sand.u32 %s63, 1
          %s157 = smul.addr %s156, 2048
          %s158 = scalar_lea.vmem [#allocation6], %s157
          %s159 = smul.u32 256, %s23
          %s160 = ssub.s32 257, %s159
          %p161 = scmp.lt.s32.totalorder %s160, 256
          %s162 = scalar_select %p161, %s160, 256
          %s163 = smul.u32 128, %s162
          %s165 = ssub.s32 32768, %s163
          %166 = vsyncadd %s155, %s165
          %p167 = scmp.ne.s32.totalorder 0, %s163
          %s168 = smul.addr %s159, 128
          %s169 = scalar_lea.hbm %s1, %s168
          %s170 = smul.u32 8, %s162
          %s171 = sshll.u32 %s158, 4
          %s172 = int_to_ptr.vmem [resolvable:$true] %s171
          %s173 = sshll.u32 %s170, 4
          %177 = dma.hbm_to_vmem [thread:$0]  (%p167), %s169, %s173, %s172, %s155, 128, 128, 8
        $region24: #{tpu_custom_call.1} parent=15 // pred_fallthru
          _
      $region16: #{tpu_custom_call.1} parent=5 // pred_fallthru
        _
      %p178 = scmp.le.s32.totalorder 1, %s15
      %p179 = scmp.lt.s32.totalorder %s15, 3
      %p180 = pnand %p178, %p179
      %p181 = pneg %p180
      // Predicated region
      $region25: #{tpu_custom_call.1} parent=5 // pred_check
        _
      $region26: #{tpu_custom_call.1} parent=5 // pred_check_branch
        %183 = sbr.rel (%p180) target = $region28
      $region27: #{tpu_custom_call.1} parent=5 // pred_region
        %s184 = ssub.s32 %s15, 1
        %s185 = sand.u32 %s40, 1
        %s186 = scalar_lea.sflag [#allocation4], %s185
        %s187 = sand.u32 %s40, 1
        %s188 = smul.addr %s187, 2048
        %s189 = scalar_lea.vmem [#allocation3], %s188
        // Predicated region
        $region29: #{tpu_custom_call.1} parent=27 // pred_check
          %p190 = pneg %p53
        $region30: #{tpu_custom_call.1} parent=27 // pred_check_branch
          %192 = sbr.rel (%p190) target = $region32
        $region31: #{tpu_custom_call.1} parent=27 // pred_region
          %193 = dma.done %s186, 32768
        $region32: #{tpu_custom_call.1} parent=27 // pred_fallthru
          _
        %s194 = sand.u32 %s66, 1
        %s195 = scalar_lea.sflag [#allocation7], %s194
        %s196 = sand.u32 %s66, 1
        %s197 = smul.addr %s196, 2048
        %s198 = scalar_lea.vmem [#allocation6], %s197
        // Predicated region
        $region33: #{tpu_custom_call.1} parent=27 // pred_check
          %p199 = pneg %p79
        $region34: #{tpu_custom_call.1} parent=27 // pred_check_branch
          %201 = sbr.rel (%p199) target = $region36
        $region35: #{tpu_custom_call.1} parent=27 // pred_region
          %202 = dma.done %s195, 32768
        $region36: #{tpu_custom_call.1} parent=27 // pred_fallthru
          _
        %s203 = sand.u32 %s40, 1
        %s204 = scalar_lea.sflag [#allocation4], %s203
        %s205 = sand.u32 %s40, 1
        %s206 = smul.addr %s205, 2048
        %s207 = scalar_lea.vmem [#allocation3], %s206
        %p208 = pneg %p53
        %p209 = pneg %p50
        %s210 = sand.u32 %s66, 1
        %s211 = scalar_lea.sflag [#allocation7], %s210
        %s212 = sand.u32 %s66, 1
        %s213 = smul.addr %s212, 2048
        %s214 = scalar_lea.vmem [#allocation6], %s213
        %p215 = pneg %p79
        %p216 = pneg %p76
        %p217 = pneg %p105
        %p218 = pneg %p102
        %s219 = smul.u32 256, %s25
        %s220 = ssub.s32 257, %s219
        %p221 = scmp.lt.s32.totalorder %s220, 256
        %s222 = scalar_select %p221, %s220, 256
        %s223 = smul.u32 128, %s222
        %s224 = smul.u32 256, %s25
        %s225 = ssub.s32 257, %s224
        %p226 = scmp.lt.s32.totalorder %s225, 256
        %s227 = scalar_select %p226, %s225, 256
        %s228 = smul.u32 128, %s227
        %s229 = smul.u32 %s24, 2
        %s230 = sadd.s32 %s229, %s25
        %p231 = scmp.eq.s32.totalorder %s25, 0
        // Predicated region
        $region37: #{tpu_custom_call.1} parent=27 // pred_check
          %p232 = pneg %p231
        $region38: #{tpu_custom_call.1} parent=27 // pred_check_branch
          %234 = sbr.rel (%p232) target = $region40
        $region39: #{tpu_custom_call.1} parent=27 // pred_region
          %235 = vst [vmem:[#allocation2] sm:$0xff] 0.0
        $region40: #{tpu_custom_call.1} parent=27 // pred_fallthru
          _
        %v236 = vld [vmem:[%s189] sm:$0xff]
        %v237 = vld [vmem:[%s189 + $0x8] sm:$0xff]
        %v238 = vld [vmem:[%s189 + $0x10] sm:$0xff]
        %v239 = vld [vmem:[%s189 + $0x18] sm:$0xff]
        %v240 = vld [vmem:[%s189 + $0x20] sm:$0xff]
        %v241 = vld [vmem:[%s189 + $0x28] sm:$0xff]
        %v242 = vld [vmem:[%s189 + $0x30] sm:$0xff]
        %v243 = vld [vmem:[%s189 + $0x38] sm:$0xff]
        %v244 = vld [vmem:[%s189 + $0x40] sm:$0xff]
        %v245 = vld [vmem:[%s189 + $0x48] sm:$0xff]
        %v246 = vld [vmem:[%s189 + $0x50] sm:$0xff]
        %v247 = vld [vmem:[%s189 + $0x58] sm:$0xff]
        %v248 = vld [vmem:[%s189 + $0x60] sm:$0xff]
        %v249 = vld [vmem:[%s189 + $0x68] sm:$0xff]
        %v250 = vld [vmem:[%s189 + $0x70] sm:$0xff]
        %v251 = vld [vmem:[%s189 + $0x78] sm:$0xff]
        %v252 = vld [vmem:[%s189 + $0x80] sm:$0xff]
        %v253 = vld [vmem:[%s189 + $0x88] sm:$0xff]
        %v254 = vld [vmem:[%s189 + $0x90] sm:$0xff]
        %v255 = vld [vmem:[%s189 + $0x98] sm:$0xff]
        %v256 = vld [vmem:[%s189 + $0xa0] sm:$0xff]
        %v257 = vld [vmem:[%s189 + $0xa8] sm:$0xff]
        %v258 = vld [vmem:[%s189 + $0xb0] sm:$0xff]
        %v259 = vld [vmem:[%s189 + $0xb8] sm:$0xff]
        %v260 = vld [vmem:[%s189 + $0xc0] sm:$0xff]
        %v261 = vld [vmem:[%s189 + $0xc8] sm:$0xff]
        %v262 = vld [vmem:[%s189 + $0xd0] sm:$0xff]
        %v263 = vld [vmem:[%s189 + $0xd8] sm:$0xff]
        %v264 = vld [vmem:[%s189 + $0xe0] sm:$0xff]
        %v265 = vld [vmem:[%s189 + $0xe8] sm:$0xff]
        %v266 = vld [vmem:[%s189 + $0xf0] sm:$0xff]
        %v267 = vld [vmem:[%s189 + $0xf8] sm:$0xff]
        %v268 = vld [vmem:[%s189 + $0x100] sm:$0xff]
        %v269 = vld [vmem:[%s189 + $0x108] sm:$0xff]
        %v270 = vld [vmem:[%s189 + $0x110] sm:$0xff]
        %v271 = vld [vmem:[%s189 + $0x118] sm:$0xff]
        %v272 = vld [vmem:[%s189 + $0x120] sm:$0xff]
        %v273 = vld [vmem:[%s189 + $0x128] sm:$0xff]
        %v274 = vld [vmem:[%s189 + $0x130] sm:$0xff]
        %v275 = vld [vmem:[%s189 + $0x138] sm:$0xff]
        %v276 = vld [vmem:[%s189 + $0x140] sm:$0xff]
        %v277 = vld [vmem:[%s189 + $0x148] sm:$0xff]
        %v278 = vld [vmem:[%s189 + $0x150] sm:$0xff]
        %v279 = vld [vmem:[%s189 + $0x158] sm:$0xff]
        %v280 = vld [vmem:[%s189 + $0x160] sm:$0xff]
        %v281 = vld [vmem:[%s189 + $0x168] sm:$0xff]
        %v282 = vld [vmem:[%s189 + $0x170] sm:$0xff]
        %v283 = vld [vmem:[%s189 + $0x178] sm:$0xff]
        %v284 = vld [vmem:[%s189 + $0x180] sm:$0xff]
        %v285 = vld [vmem:[%s189 + $0x188] sm:$0xff]
        %v286 = vld [vmem:[%s189 + $0x190] sm:$0xff]
        %v287 = vld [vmem:[%s189 + $0x198] sm:$0xff]
        %v288 = vld [vmem:[%s189 + $0x1a0] sm:$0xff]
        %v289 = vld [vmem:[%s189 + $0x1a8] sm:$0xff]
        %v290 = vld [vmem:[%s189 + $0x1b0] sm:$0xff]
        %v291 = vld [vmem:[%s189 + $0x1b8] sm:$0xff]
        %v292 = vld [vmem:[%s189 + $0x1c0] sm:$0xff]
        %v293 = vld [vmem:[%s189 + $0x1c8] sm:$0xff]
        %v294 = vld [vmem:[%s189 + $0x1d0] sm:$0xff]
        %v295 = vld [vmem:[%s189 + $0x1d8] sm:$0xff]
        %v296 = vld [vmem:[%s189 + $0x1e0] sm:$0xff]
        %v297 = vld [vmem:[%s189 + $0x1e8] sm:$0xff]
        %v298 = vld [vmem:[%s189 + $0x1f0] sm:$0xff]
        %v299 = vld [vmem:[%s189 + $0x1f8] sm:$0xff]
        %v300 = vld [vmem:[%s189 + $0x200] sm:$0xff]
        %v301 = vld [vmem:[%s189 + $0x208] sm:$0xff]
        %v302 = vld [vmem:[%s189 + $0x210] sm:$0xff]
        %v303 = vld [vmem:[%s189 + $0x218] sm:$0xff]
        %v304 = vld [vmem:[%s189 + $0x220] sm:$0xff]
        %v305 = vld [vmem:[%s189 + $0x228] sm:$0xff]
        %v306 = vld [vmem:[%s189 + $0x230] sm:$0xff]
        %v307 = vld [vmem:[%s189 + $0x238] sm:$0xff]
        %v308 = vld [vmem:[%s189 + $0x240] sm:$0xff]
        %v309 = vld [vmem:[%s189 + $0x248] sm:$0xff]
        %v310 = vld [vmem:[%s189 + $0x250] sm:$0xff]
        %v311 = vld [vmem:[%s189 + $0x258] sm:$0xff]
        %v312 = vld [vmem:[%s189 + $0x260] sm:$0xff]
        %v313 = vld [vmem:[%s189 + $0x268] sm:$0xff]
        %v314 = vld [vmem:[%s189 + $0x270] sm:$0xff]
        %v315 = vld [vmem:[%s189 + $0x278] sm:$0xff]
        %v316 = vld [vmem:[%s189 + $0x280] sm:$0xff]
        %v317 = vld [vmem:[%s189 + $0x288] sm:$0xff]
        %v318 = vld [vmem:[%s189 + $0x290] sm:$0xff]
        %v319 = vld [vmem:[%s189 + $0x298] sm:$0xff]
        %v320 = vld [vmem:[%s189 + $0x2a0] sm:$0xff]
        %v321 = vld [vmem:[%s189 + $0x2a8] sm:$0xff]
        %v322 = vld [vmem:[%s189 + $0x2b0] sm:$0xff]
        %v323 = vld [vmem:[%s189 + $0x2b8] sm:$0xff]
        %v324 = vld [vmem:[%s189 + $0x2c0] sm:$0xff]
        %v325 = vld [vmem:[%s189 + $0x2c8] sm:$0xff]
        %v326 = vld [vmem:[%s189 + $0x2d0] sm:$0xff]
        %v327 = vld [vmem:[%s189 + $0x2d8] sm:$0xff]
        %v328 = vld [vmem:[%s189 + $0x2e0] sm:$0xff]
        %v329 = vld [vmem:[%s189 + $0x2e8] sm:$0xff]
        %v330 = vld [vmem:[%s189 + $0x2f0] sm:$0xff]
        %v331 = vld [vmem:[%s189 + $0x2f8] sm:$0xff]
        %v332 = vld [vmem:[%s189 + $0x300] sm:$0xff]
        %v333 = vld [vmem:[%s189 + $0x308] sm:$0xff]
        %v334 = vld [vmem:[%s189 + $0x310] sm:$0xff]
        %v335 = vld [vmem:[%s189 + $0x318] sm:$0xff]
        %v336 = vld [vmem:[%s189 + $0x320] sm:$0xff]
        %v337 = vld [vmem:[%s189 + $0x328] sm:$0xff]
        %v338 = vld [vmem:[%s189 + $0x330] sm:$0xff]
        %v339 = vld [vmem:[%s189 + $0x338] sm:$0xff]
        %v340 = vld [vmem:[%s189 + $0x340] sm:$0xff]
        %v341 = vld [vmem:[%s189 + $0x348] sm:$0xff]
        %v342 = vld [vmem:[%s189 + $0x350] sm:$0xff]
        %v343 = vld [vmem:[%s189 + $0x358] sm:$0xff]
        %v344 = vld [vmem:[%s189 + $0x360] sm:$0xff]
        %v345 = vld [vmem:[%s189 + $0x368] sm:$0xff]
        %v346 = vld [vmem:[%s189 + $0x370] sm:$0xff]
        %v347 = vld [vmem:[%s189 + $0x378] sm:$0xff]
        %v348 = vld [vmem:[%s189 + $0x380] sm:$0xff]
        %v349 = vld [vmem:[%s189 + $0x388] sm:$0xff]
        %v350 = vld [vmem:[%s189 + $0x390] sm:$0xff]
        %v351 = vld [vmem:[%s189 + $0x398] sm:$0xff]
        %v352 = vld [vmem:[%s189 + $0x3a0] sm:$0xff]
        %v353 = vld [vmem:[%s189 + $0x3a8] sm:$0xff]
        %v354 = vld [vmem:[%s189 + $0x3b0] sm:$0xff]
        %v355 = vld [vmem:[%s189 + $0x3b8] sm:$0xff]
        %v356 = vld [vmem:[%s189 + $0x3c0] sm:$0xff]
        %v357 = vld [vmem:[%s189 + $0x3c8] sm:$0xff]
        %v358 = vld [vmem:[%s189 + $0x3d0] sm:$0xff]
        %v359 = vld [vmem:[%s189 + $0x3d8] sm:$0xff]
        %v360 = vld [vmem:[%s189 + $0x3e0] sm:$0xff]
        %v361 = vld [vmem:[%s189 + $0x3e8] sm:$0xff]
        %v362 = vld [vmem:[%s189 + $0x3f0] sm:$0xff]
        %v363 = vld [vmem:[%s189 + $0x3f8] sm:$0xff]
        %v364 = vld [vmem:[%s189 + $0x400] sm:$0xff]
        %v365 = vld [vmem:[%s189 + $0x408] sm:$0xff]
        %v366 = vld [vmem:[%s189 + $0x410] sm:$0xff]
        %v367 = vld [vmem:[%s189 + $0x418] sm:$0xff]
        %v368 = vld [vmem:[%s189 + $0x420] sm:$0xff]
        %v369 = vld [vmem:[%s189 + $0x428] sm:$0xff]
        %v370 = vld [vmem:[%s189 + $0x430] sm:$0xff]
        %v371 = vld [vmem:[%s189 + $0x438] sm:$0xff]
        %v372 = vld [vmem:[%s189 + $0x440] sm:$0xff]
        %v373 = vld [vmem:[%s189 + $0x448] sm:$0xff]
        %v374 = vld [vmem:[%s189 + $0x450] sm:$0xff]
        %v375 = vld [vmem:[%s189 + $0x458] sm:$0xff]
        %v376 = vld [vmem:[%s189 + $0x460] sm:$0xff]
        %v377 = vld [vmem:[%s189 + $0x468] sm:$0xff]
        %v378 = vld [vmem:[%s189 + $0x470] sm:$0xff]
        %v379 = vld [vmem:[%s189 + $0x478] sm:$0xff]
        %v380 = vld [vmem:[%s189 + $0x480] sm:$0xff]
        %v381 = vld [vmem:[%s189 + $0x488] sm:$0xff]
        %v382 = vld [vmem:[%s189 + $0x490] sm:$0xff]
        %v383 = vld [vmem:[%s189 + $0x498] sm:$0xff]
        %v384 = vld [vmem:[%s189 + $0x4a0] sm:$0xff]
        %v385 = vld [vmem:[%s189 + $0x4a8] sm:$0xff]
        %v386 = vld [vmem:[%s189 + $0x4b0] sm:$0xff]
        %v387 = vld [vmem:[%s189 + $0x4b8] sm:$0xff]
        %v388 = vld [vmem:[%s189 + $0x4c0] sm:$0xff]
        %v389 = vld [vmem:[%s189 + $0x4c8] sm:$0xff]
        %v390 = vld [vmem:[%s189 + $0x4d0] sm:$0xff]
        %v391 = vld [vmem:[%s189 + $0x4d8] sm:$0xff]
        %v392 = vld [vmem:[%s189 + $0x4e0] sm:$0xff]
        %v393 = vld [vmem:[%s189 + $0x4e8] sm:$0xff]
        %v394 = vld [vmem:[%s189 + $0x4f0] sm:$0xff]
        %v395 = vld [vmem:[%s189 + $0x4f8] sm:$0xff]
        %v396 = vld [vmem:[%s189 + $0x500] sm:$0xff]
        %v397 = vld [vmem:[%s189 + $0x508] sm:$0xff]
        %v398 = vld [vmem:[%s189 + $0x510] sm:$0xff]
        %v399 = vld [vmem:[%s189 + $0x518] sm:$0xff]
        %v400 = vld [vmem:[%s189 + $0x520] sm:$0xff]
        %v401 = vld [vmem:[%s189 + $0x528] sm:$0xff]
        %v402 = vld [vmem:[%s189 + $0x530] sm:$0xff]
        %v403 = vld [vmem:[%s189 + $0x538] sm:$0xff]
        %v404 = vld [vmem:[%s189 + $0x540] sm:$0xff]
        %v405 = vld [vmem:[%s189 + $0x548] sm:$0xff]
        %v406 = vld [vmem:[%s189 + $0x550] sm:$0xff]
        %v407 = vld [vmem:[%s189 + $0x558] sm:$0xff]
        %v408 = vld [vmem:[%s189 + $0x560] sm:$0xff]
        %v409 = vld [vmem:[%s189 + $0x568] sm:$0xff]
        %v410 = vld [vmem:[%s189 + $0x570] sm:$0xff]
        %v411 = vld [vmem:[%s189 + $0x578] sm:$0xff]
        %v412 = vld [vmem:[%s189 + $0x580] sm:$0xff]
        %v413 = vld [vmem:[%s189 + $0x588] sm:$0xff]
        %v414 = vld [vmem:[%s189 + $0x590] sm:$0xff]
        %v415 = vld [vmem:[%s189 + $0x598] sm:$0xff]
        %v416 = vld [vmem:[%s189 + $0x5a0] sm:$0xff]
        %v417 = vld [vmem:[%s189 + $0x5a8] sm:$0xff]
        %v418 = vld [vmem:[%s189 + $0x5b0] sm:$0xff]
        %v419 = vld [vmem:[%s189 + $0x5b8] sm:$0xff]
        %v420 = vld [vmem:[%s189 + $0x5c0] sm:$0xff]
        %v421 = vld [vmem:[%s189 + $0x5c8] sm:$0xff]
        %v422 = vld [vmem:[%s189 + $0x5d0] sm:$0xff]
        %v423 = vld [vmem:[%s189 + $0x5d8] sm:$0xff]
        %v424 = vld [vmem:[%s189 + $0x5e0] sm:$0xff]
        %v425 = vld [vmem:[%s189 + $0x5e8] sm:$0xff]
        %v426 = vld [vmem:[%s189 + $0x5f0] sm:$0xff]
        %v427 = vld [vmem:[%s189 + $0x5f8] sm:$0xff]
        %v428 = vld [vmem:[%s189 + $0x600] sm:$0xff]
        %v429 = vld [vmem:[%s189 + $0x608] sm:$0xff]
        %v430 = vld [vmem:[%s189 + $0x610] sm:$0xff]
        %v431 = vld [vmem:[%s189 + $0x618] sm:$0xff]
        %v432 = vld [vmem:[%s189 + $0x620] sm:$0xff]
        %v433 = vld [vmem:[%s189 + $0x628] sm:$0xff]
        %v434 = vld [vmem:[%s189 + $0x630] sm:$0xff]
        %v435 = vld [vmem:[%s189 + $0x638] sm:$0xff]
        %v436 = vld [vmem:[%s189 + $0x640] sm:$0xff]
        %v437 = vld [vmem:[%s189 + $0x648] sm:$0xff]
        %v438 = vld [vmem:[%s189 + $0x650] sm:$0xff]
        %v439 = vld [vmem:[%s189 + $0x658] sm:$0xff]
        %v440 = vld [vmem:[%s189 + $0x660] sm:$0xff]
        %v441 = vld [vmem:[%s189 + $0x668] sm:$0xff]
        %v442 = vld [vmem:[%s189 + $0x670] sm:$0xff]
        %v443 = vld [vmem:[%s189 + $0x678] sm:$0xff]
        %v444 = vld [vmem:[%s189 + $0x680] sm:$0xff]
        %v445 = vld [vmem:[%s189 + $0x688] sm:$0xff]
        %v446 = vld [vmem:[%s189 + $0x690] sm:$0xff]
        %v447 = vld [vmem:[%s189 + $0x698] sm:$0xff]
        %v448 = vld [vmem:[%s189 + $0x6a0] sm:$0xff]
        %v449 = vld [vmem:[%s189 + $0x6a8] sm:$0xff]
        %v450 = vld [vmem:[%s189 + $0x6b0] sm:$0xff]
        %v451 = vld [vmem:[%s189 + $0x6b8] sm:$0xff]
        %v452 = vld [vmem:[%s189 + $0x6c0] sm:$0xff]
        %v453 = vld [vmem:[%s189 + $0x6c8] sm:$0xff]
        %v454 = vld [vmem:[%s189 + $0x6d0] sm:$0xff]
        %v455 = vld [vmem:[%s189 + $0x6d8] sm:$0xff]
        %v456 = vld [vmem:[%s189 + $0x6e0] sm:$0xff]
        %v457 = vld [vmem:[%s189 + $0x6e8] sm:$0xff]
        %v458 = vld [vmem:[%s189 + $0x6f0] sm:$0xff]
        %v459 = vld [vmem:[%s189 + $0x6f8] sm:$0xff]
        %v460 = vld [vmem:[%s189 + $0x700] sm:$0xff]
        %v461 = vld [vmem:[%s189 + $0x708] sm:$0xff]
        %v462 = vld [vmem:[%s189 + $0x710] sm:$0xff]
        %v463 = vld [vmem:[%s189 + $0x718] sm:$0xff]
        %v464 = vld [vmem:[%s189 + $0x720] sm:$0xff]
        %v465 = vld [vmem:[%s189 + $0x728] sm:$0xff]
        %v466 = vld [vmem:[%s189 + $0x730] sm:$0xff]
        %v467 = vld [vmem:[%s189 + $0x738] sm:$0xff]
        %v468 = vld [vmem:[%s189 + $0x740] sm:$0xff]
        %v469 = vld [vmem:[%s189 + $0x748] sm:$0xff]
        %v470 = vld [vmem:[%s189 + $0x750] sm:$0xff]
        %v471 = vld [vmem:[%s189 + $0x758] sm:$0xff]
        %v472 = vld [vmem:[%s189 + $0x760] sm:$0xff]
        %v473 = vld [vmem:[%s189 + $0x768] sm:$0xff]
        %v474 = vld [vmem:[%s189 + $0x770] sm:$0xff]
        %v475 = vld [vmem:[%s189 + $0x778] sm:$0xff]
        %v476 = vld [vmem:[%s189 + $0x780] sm:$0xff]
        %v477 = vld [vmem:[%s189 + $0x788] sm:$0xff]
        %v478 = vld [vmem:[%s189 + $0x790] sm:$0xff]
        %v479 = vld [vmem:[%s189 + $0x798] sm:$0xff]
        %v480 = vld [vmem:[%s189 + $0x7a0] sm:$0xff]
        %v481 = vld [vmem:[%s189 + $0x7a8] sm:$0xff]
        %v482 = vld [vmem:[%s189 + $0x7b0] sm:$0xff]
        %v483 = vld [vmem:[%s189 + $0x7b8] sm:$0xff]
        %v484 = vld [vmem:[%s189 + $0x7c0] sm:$0xff]
        %v485 = vld [vmem:[%s189 + $0x7c8] sm:$0xff]
        %v486 = vld [vmem:[%s189 + $0x7d0] sm:$0xff]
        %v487 = vld [vmem:[%s189 + $0x7d8] sm:$0xff]
        %v488 = vld [vmem:[%s189 + $0x7e0] sm:$0xff]
        %v489 = vld [vmem:[%s189 + $0x7e8] sm:$0xff]
        %v490 = vld [vmem:[%s189 + $0x7f0] sm:$0xff]
        %v491 = vld [vmem:[%s189 + $0x7f8] sm:$0xff]
        %v492 = vld [vmem:[%s198] sm:$0xff]
        %v493 = vld [vmem:[%s198 + $0x8] sm:$0xff]
        %v494 = vld [vmem:[%s198 + $0x10] sm:$0xff]
        %v495 = vld [vmem:[%s198 + $0x18] sm:$0xff]
        %v496 = vld [vmem:[%s198 + $0x20] sm:$0xff]
        %v497 = vld [vmem:[%s198 + $0x28] sm:$0xff]
        %v498 = vld [vmem:[%s198 + $0x30] sm:$0xff]
        %v499 = vld [vmem:[%s198 + $0x38] sm:$0xff]
        %v500 = vld [vmem:[%s198 + $0x40] sm:$0xff]
        %v501 = vld [vmem:[%s198 + $0x48] sm:$0xff]
        %v502 = vld [vmem:[%s198 + $0x50] sm:$0xff]
        %v503 = vld [vmem:[%s198 + $0x58] sm:$0xff]
        %v504 = vld [vmem:[%s198 + $0x60] sm:$0xff]
        %v505 = vld [vmem:[%s198 + $0x68] sm:$0xff]
        %v506 = vld [vmem:[%s198 + $0x70] sm:$0xff]
        %v507 = vld [vmem:[%s198 + $0x78] sm:$0xff]
        %v508 = vld [vmem:[%s198 + $0x80] sm:$0xff]
        %v509 = vld [vmem:[%s198 + $0x88] sm:$0xff]
        %v510 = vld [vmem:[%s198 + $0x90] sm:$0xff]
        %v511 = vld [vmem:[%s198 + $0x98] sm:$0xff]
        %v512 = vld [vmem:[%s198 + $0xa0] sm:$0xff]
        %v513 = vld [vmem:[%s198 + $0xa8] sm:$0xff]
        %v514 = vld [vmem:[%s198 + $0xb0] sm:$0xff]
        %v515 = vld [vmem:[%s198 + $0xb8] sm:$0xff]
        %v516 = vld [vmem:[%s198 + $0xc0] sm:$0xff]
        %v517 = vld [vmem:[%s198 + $0xc8] sm:$0xff]
        %v518 = vld [vmem:[%s198 + $0xd0] sm:$0xff]
        %v519 = vld [vmem:[%s198 + $0xd8] sm:$0xff]
        %v520 = vld [vmem:[%s198 + $0xe0] sm:$0xff]
        %v521 = vld [vmem:[%s198 + $0xe8] sm:$0xff]
        %v522 = vld [vmem:[%s198 + $0xf0] sm:$0xff]
        %v523 = vld [vmem:[%s198 + $0xf8] sm:$0xff]
        %v524 = vld [vmem:[%s198 + $0x100] sm:$0xff]
        %v525 = vld [vmem:[%s198 + $0x108] sm:$0xff]
        %v526 = vld [vmem:[%s198 + $0x110] sm:$0xff]
        %v527 = vld [vmem:[%s198 + $0x118] sm:$0xff]
        %v528 = vld [vmem:[%s198 + $0x120] sm:$0xff]
        %v529 = vld [vmem:[%s198 + $0x128] sm:$0xff]
        %v530 = vld [vmem:[%s198 + $0x130] sm:$0xff]
        %v531 = vld [vmem:[%s198 + $0x138] sm:$0xff]
        %v532 = vld [vmem:[%s198 + $0x140] sm:$0xff]
        %v533 = vld [vmem:[%s198 + $0x148] sm:$0xff]
        %v534 = vld [vmem:[%s198 + $0x150] sm:$0xff]
        %v535 = vld [vmem:[%s198 + $0x158] sm:$0xff]
        %v536 = vld [vmem:[%s198 + $0x160] sm:$0xff]
        %v537 = vld [vmem:[%s198 + $0x168] sm:$0xff]
        %v538 = vld [vmem:[%s198 + $0x170] sm:$0xff]
        %v539 = vld [vmem:[%s198 + $0x178] sm:$0xff]
        %v540 = vld [vmem:[%s198 + $0x180] sm:$0xff]
        %v541 = vld [vmem:[%s198 + $0x188] sm:$0xff]
        %v542 = vld [vmem:[%s198 + $0x190] sm:$0xff]
        %v543 = vld [vmem:[%s198 + $0x198] sm:$0xff]
        %v544 = vld [vmem:[%s198 + $0x1a0] sm:$0xff]
        %v545 = vld [vmem:[%s198 + $0x1a8] sm:$0xff]
        %v546 = vld [vmem:[%s198 + $0x1b0] sm:$0xff]
        %v547 = vld [vmem:[%s198 + $0x1b8] sm:$0xff]
        %v548 = vld [vmem:[%s198 + $0x1c0] sm:$0xff]
        %v549 = vld [vmem:[%s198 + $0x1c8] sm:$0xff]
        %v550 = vld [vmem:[%s198 + $0x1d0] sm:$0xff]
        %v551 = vld [vmem:[%s198 + $0x1d8] sm:$0xff]
        %v552 = vld [vmem:[%s198 + $0x1e0] sm:$0xff]
        %v553 = vld [vmem:[%s198 + $0x1e8] sm:$0xff]
        %v554 = vld [vmem:[%s198 + $0x1f0] sm:$0xff]
        %v555 = vld [vmem:[%s198 + $0x1f8] sm:$0xff]
        %v556 = vld [vmem:[%s198 + $0x200] sm:$0xff]
        %v557 = vld [vmem:[%s198 + $0x208] sm:$0xff]
        %v558 = vld [vmem:[%s198 + $0x210] sm:$0xff]
        %v559 = vld [vmem:[%s198 + $0x218] sm:$0xff]
        %v560 = vld [vmem:[%s198 + $0x220] sm:$0xff]
        %v561 = vld [vmem:[%s198 + $0x228] sm:$0xff]
        %v562 = vld [vmem:[%s198 + $0x230] sm:$0xff]
        %v563 = vld [vmem:[%s198 + $0x238] sm:$0xff]
        %v564 = vld [vmem:[%s198 + $0x240] sm:$0xff]
        %v565 = vld [vmem:[%s198 + $0x248] sm:$0xff]
        %v566 = vld [vmem:[%s198 + $0x250] sm:$0xff]
        %v567 = vld [vmem:[%s198 + $0x258] sm:$0xff]
        %v568 = vld [vmem:[%s198 + $0x260] sm:$0xff]
        %v569 = vld [vmem:[%s198 + $0x268] sm:$0xff]
        %v570 = vld [vmem:[%s198 + $0x270] sm:$0xff]
        %v571 = vld [vmem:[%s198 + $0x278] sm:$0xff]
        %v572 = vld [vmem:[%s198 + $0x280] sm:$0xff]
        %v573 = vld [vmem:[%s198 + $0x288] sm:$0xff]
        %v574 = vld [vmem:[%s198 + $0x290] sm:$0xff]
        %v575 = vld [vmem:[%s198 + $0x298] sm:$0xff]
        %v576 = vld [vmem:[%s198 + $0x2a0] sm:$0xff]
        %v577 = vld [vmem:[%s198 + $0x2a8] sm:$0xff]
        %v578 = vld [vmem:[%s198 + $0x2b0] sm:$0xff]
        %v579 = vld [vmem:[%s198 + $0x2b8] sm:$0xff]
        %v580 = vld [vmem:[%s198 + $0x2c0] sm:$0xff]
        %v581 = vld [vmem:[%s198 + $0x2c8] sm:$0xff]
        %v582 = vld [vmem:[%s198 + $0x2d0] sm:$0xff]
        %v583 = vld [vmem:[%s198 + $0x2d8] sm:$0xff]
        %v584 = vld [vmem:[%s198 + $0x2e0] sm:$0xff]
        %v585 = vld [vmem:[%s198 + $0x2e8] sm:$0xff]
        %v586 = vld [vmem:[%s198 + $0x2f0] sm:$0xff]
        %v587 = vld [vmem:[%s198 + $0x2f8] sm:$0xff]
        %v588 = vld [vmem:[%s198 + $0x300] sm:$0xff]
        %v589 = vld [vmem:[%s198 + $0x308] sm:$0xff]
        %v590 = vld [vmem:[%s198 + $0x310] sm:$0xff]
        %v591 = vld [vmem:[%s198 + $0x318] sm:$0xff]
        %v592 = vld [vmem:[%s198 + $0x320] sm:$0xff]
        %v593 = vld [vmem:[%s198 + $0x328] sm:$0xff]
        %v594 = vld [vmem:[%s198 + $0x330] sm:$0xff]
        %v595 = vld [vmem:[%s198 + $0x338] sm:$0xff]
        %v596 = vld [vmem:[%s198 + $0x340] sm:$0xff]
        %v597 = vld [vmem:[%s198 + $0x348] sm:$0xff]
        %v598 = vld [vmem:[%s198 + $0x350] sm:$0xff]
        %v599 = vld [vmem:[%s198 + $0x358] sm:$0xff]
        %v600 = vld [vmem:[%s198 + $0x360] sm:$0xff]
        %v601 = vld [vmem:[%s198 + $0x368] sm:$0xff]
        %v602 = vld [vmem:[%s198 + $0x370] sm:$0xff]
        %v603 = vld [vmem:[%s198 + $0x378] sm:$0xff]
        %v604 = vld [vmem:[%s198 + $0x380] sm:$0xff]
        %v605 = vld [vmem:[%s198 + $0x388] sm:$0xff]
        %v606 = vld [vmem:[%s198 + $0x390] sm:$0xff]
        %v607 = vld [vmem:[%s198 + $0x398] sm:$0xff]
        %v608 = vld [vmem:[%s198 + $0x3a0] sm:$0xff]
        %v609 = vld [vmem:[%s198 + $0x3a8] sm:$0xff]
        %v610 = vld [vmem:[%s198 + $0x3b0] sm:$0xff]
        %v611 = vld [vmem:[%s198 + $0x3b8] sm:$0xff]
        %v612 = vld [vmem:[%s198 + $0x3c0] sm:$0xff]
        %v613 = vld [vmem:[%s198 + $0x3c8] sm:$0xff]
        %v614 = vld [vmem:[%s198 + $0x3d0] sm:$0xff]
        %v615 = vld [vmem:[%s198 + $0x3d8] sm:$0xff]
        %v616 = vld [vmem:[%s198 + $0x3e0] sm:$0xff]
        %v617 = vld [vmem:[%s198 + $0x3e8] sm:$0xff]
        %v618 = vld [vmem:[%s198 + $0x3f0] sm:$0xff]
        %v619 = vld [vmem:[%s198 + $0x3f8] sm:$0xff]
        %v620 = vld [vmem:[%s198 + $0x400] sm:$0xff]
        %v621 = vld [vmem:[%s198 + $0x408] sm:$0xff]
        %v622 = vld [vmem:[%s198 + $0x410] sm:$0xff]
        %v623 = vld [vmem:[%s198 + $0x418] sm:$0xff]
        %v624 = vld [vmem:[%s198 + $0x420] sm:$0xff]
        %v625 = vld [vmem:[%s198 + $0x428] sm:$0xff]
        %v626 = vld [vmem:[%s198 + $0x430] sm:$0xff]
        %v627 = vld [vmem:[%s198 + $0x438] sm:$0xff]
        %v628 = vld [vmem:[%s198 + $0x440] sm:$0xff]
        %v629 = vld [vmem:[%s198 + $0x448] sm:$0xff]
        %v630 = vld [vmem:[%s198 + $0x450] sm:$0xff]
        %v631 = vld [vmem:[%s198 + $0x458] sm:$0xff]
        %v632 = vld [vmem:[%s198 + $0x460] sm:$0xff]
        %v633 = vld [vmem:[%s198 + $0x468] sm:$0xff]
        %v634 = vld [vmem:[%s198 + $0x470] sm:$0xff]
        %v635 = vld [vmem:[%s198 + $0x478] sm:$0xff]
        %v636 = vld [vmem:[%s198 + $0x480] sm:$0xff]
        %v637 = vld [vmem:[%s198 + $0x488] sm:$0xff]
        %v638 = vld [vmem:[%s198 + $0x490] sm:$0xff]
        %v639 = vld [vmem:[%s198 + $0x498] sm:$0xff]
        %v640 = vld [vmem:[%s198 + $0x4a0] sm:$0xff]
        %v641 = vld [vmem:[%s198 + $0x4a8] sm:$0xff]
        %v642 = vld [vmem:[%s198 + $0x4b0] sm:$0xff]
        %v643 = vld [vmem:[%s198 + $0x4b8] sm:$0xff]
        %v644 = vld [vmem:[%s198 + $0x4c0] sm:$0xff]
        %v645 = vld [vmem:[%s198 + $0x4c8] sm:$0xff]
        %v646 = vld [vmem:[%s198 + $0x4d0] sm:$0xff]
        %v647 = vld [vmem:[%s198 + $0x4d8] sm:$0xff]
        %v648 = vld [vmem:[%s198 + $0x4e0] sm:$0xff]
        %v649 = vld [vmem:[%s198 + $0x4e8] sm:$0xff]
        %v650 = vld [vmem:[%s198 + $0x4f0] sm:$0xff]
        %v651 = vld [vmem:[%s198 + $0x4f8] sm:$0xff]
        %v652 = vld [vmem:[%s198 + $0x500] sm:$0xff]
        %v653 = vld [vmem:[%s198 + $0x508] sm:$0xff]
        %v654 = vld [vmem:[%s198 + $0x510] sm:$0xff]
        %v655 = vld [vmem:[%s198 + $0x518] sm:$0xff]
        %v656 = vld [vmem:[%s198 + $0x520] sm:$0xff]
        %v657 = vld [vmem:[%s198 + $0x528] sm:$0xff]
        %v658 = vld [vmem:[%s198 + $0x530] sm:$0xff]
        %v659 = vld [vmem:[%s198 + $0x538] sm:$0xff]
        %v660 = vld [vmem:[%s198 + $0x540] sm:$0xff]
        %v661 = vld [vmem:[%s198 + $0x548] sm:$0xff]
        %v662 = vld [vmem:[%s198 + $0x550] sm:$0xff]
        %v663 = vld [vmem:[%s198 + $0x558] sm:$0xff]
        %v664 = vld [vmem:[%s198 + $0x560] sm:$0xff]
        %v665 = vld [vmem:[%s198 + $0x568] sm:$0xff]
        %v666 = vld [vmem:[%s198 + $0x570] sm:$0xff]
        %v667 = vld [vmem:[%s198 + $0x578] sm:$0xff]
        %v668 = vld [vmem:[%s198 + $0x580] sm:$0xff]
        %v669 = vld [vmem:[%s198 + $0x588] sm:$0xff]
        %v670 = vld [vmem:[%s198 + $0x590] sm:$0xff]
        %v671 = vld [vmem:[%s198 + $0x598] sm:$0xff]
        %v672 = vld [vmem:[%s198 + $0x5a0] sm:$0xff]
        %v673 = vld [vmem:[%s198 + $0x5a8] sm:$0xff]
        %v674 = vld [vmem:[%s198 + $0x5b0] sm:$0xff]
        %v675 = vld [vmem:[%s198 + $0x5b8] sm:$0xff]
        %v676 = vld [vmem:[%s198 + $0x5c0] sm:$0xff]
        %v677 = vld [vmem:[%s198 + $0x5c8] sm:$0xff]
        %v678 = vld [vmem:[%s198 + $0x5d0] sm:$0xff]
        %v679 = vld [vmem:[%s198 + $0x5d8] sm:$0xff]
        %v680 = vld [vmem:[%s198 + $0x5e0] sm:$0xff]
        %v681 = vld [vmem:[%s198 + $0x5e8] sm:$0xff]
        %v682 = vld [vmem:[%s198 + $0x5f0] sm:$0xff]
        %v683 = vld [vmem:[%s198 + $0x5f8] sm:$0xff]
        %v684 = vld [vmem:[%s198 + $0x600] sm:$0xff]
        %v685 = vld [vmem:[%s198 + $0x608] sm:$0xff]
        %v686 = vld [vmem:[%s198 + $0x610] sm:$0xff]
        %v687 = vld [vmem:[%s198 + $0x618] sm:$0xff]
        %v688 = vld [vmem:[%s198 + $0x620] sm:$0xff]
        %v689 = vld [vmem:[%s198 + $0x628] sm:$0xff]
        %v690 = vld [vmem:[%s198 + $0x630] sm:$0xff]
        %v691 = vld [vmem:[%s198 + $0x638] sm:$0xff]
        %v692 = vld [vmem:[%s198 + $0x640] sm:$0xff]
        %v693 = vld [vmem:[%s198 + $0x648] sm:$0xff]
        %v694 = vld [vmem:[%s198 + $0x650] sm:$0xff]
        %v695 = vld [vmem:[%s198 + $0x658] sm:$0xff]
        %v696 = vld [vmem:[%s198 + $0x660] sm:$0xff]
        %v697 = vld [vmem:[%s198 + $0x668] sm:$0xff]
        %v698 = vld [vmem:[%s198 + $0x670] sm:$0xff]
        %v699 = vld [vmem:[%s198 + $0x678] sm:$0xff]
        %v700 = vld [vmem:[%s198 + $0x680] sm:$0xff]
        %v701 = vld [vmem:[%s198 + $0x688] sm:$0xff]
        %v702 = vld [vmem:[%s198 + $0x690] sm:$0xff]
        %v703 = vld [vmem:[%s198 + $0x698] sm:$0xff]
        %v704 = vld [vmem:[%s198 + $0x6a0] sm:$0xff]
        %v705 = vld [vmem:[%s198 + $0x6a8] sm:$0xff]
        %v706 = vld [vmem:[%s198 + $0x6b0] sm:$0xff]
        %v707 = vld [vmem:[%s198 + $0x6b8] sm:$0xff]
        %v708 = vld [vmem:[%s198 + $0x6c0] sm:$0xff]
        %v709 = vld [vmem:[%s198 + $0x6c8] sm:$0xff]
        %v710 = vld [vmem:[%s198 + $0x6d0] sm:$0xff]
        %v711 = vld [vmem:[%s198 + $0x6d8] sm:$0xff]
        %v712 = vld [vmem:[%s198 + $0x6e0] sm:$0xff]
        %v713 = vld [vmem:[%s198 + $0x6e8] sm:$0xff]
        %v714 = vld [vmem:[%s198 + $0x6f0] sm:$0xff]
        %v715 = vld [vmem:[%s198 + $0x6f8] sm:$0xff]
        %v716 = vld [vmem:[%s198 + $0x700] sm:$0xff]
        %v717 = vld [vmem:[%s198 + $0x708] sm:$0xff]
        %v718 = vld [vmem:[%s198 + $0x710] sm:$0xff]
        %v719 = vld [vmem:[%s198 + $0x718] sm:$0xff]
        %v720 = vld [vmem:[%s198 + $0x720] sm:$0xff]
        %v721 = vld [vmem:[%s198 + $0x728] sm:$0xff]
        %v722 = vld [vmem:[%s198 + $0x730] sm:$0xff]
        %v723 = vld [vmem:[%s198 + $0x738] sm:$0xff]
        %v724 = vld [vmem:[%s198 + $0x740] sm:$0xff]
        %v725 = vld [vmem:[%s198 + $0x748] sm:$0xff]
        %v726 = vld [vmem:[%s198 + $0x750] sm:$0xff]
        %v727 = vld [vmem:[%s198 + $0x758] sm:$0xff]
        %v728 = vld [vmem:[%s198 + $0x760] sm:$0xff]
        %v729 = vld [vmem:[%s198 + $0x768] sm:$0xff]
        %v730 = vld [vmem:[%s198 + $0x770] sm:$0xff]
        %v731 = vld [vmem:[%s198 + $0x778] sm:$0xff]
        %v732 = vld [vmem:[%s198 + $0x780] sm:$0xff]
        %v733 = vld [vmem:[%s198 + $0x788] sm:$0xff]
        %v734 = vld [vmem:[%s198 + $0x790] sm:$0xff]
        %v735 = vld [vmem:[%s198 + $0x798] sm:$0xff]
        %v736 = vld [vmem:[%s198 + $0x7a0] sm:$0xff]
        %v737 = vld [vmem:[%s198 + $0x7a8] sm:$0xff]
        %v738 = vld [vmem:[%s198 + $0x7b0] sm:$0xff]
        %v739 = vld [vmem:[%s198 + $0x7b8] sm:$0xff]
        %v740 = vld [vmem:[%s198 + $0x7c0] sm:$0xff]
        %v741 = vld [vmem:[%s198 + $0x7c8] sm:$0xff]
        %v742 = vld [vmem:[%s198 + $0x7d0] sm:$0xff]
        %v743 = vld [vmem:[%s198 + $0x7d8] sm:$0xff]
        %v744 = vld [vmem:[%s198 + $0x7e0] sm:$0xff]
        %v745 = vld [vmem:[%s198 + $0x7e8] sm:$0xff]
        %v746 = vld [vmem:[%s198 + $0x7f0] sm:$0xff]
        %v747 = vld [vmem:[%s198 + $0x7f8] sm:$0xff]
        %v748 = vsub.f32 %v236, %v492
        %v749 = vsub.f32 %v237, %v493
        %v750 = vsub.f32 %v238, %v494
        %v751 = vsub.f32 %v239, %v495
        %v752 = vsub.f32 %v240, %v496
        %v753 = vsub.f32 %v241, %v497
        %v754 = vsub.f32 %v242, %v498
        %v755 = vsub.f32 %v243, %v499
        %v756 = vsub.f32 %v244, %v500
        %v757 = vsub.f32 %v245, %v501
        %v758 = vsub.f32 %v246, %v502
        %v759 = vsub.f32 %v247, %v503
        %v760 = vsub.f32 %v248, %v504
        %v761 = vsub.f32 %v249, %v505
        %v762 = vsub.f32 %v250, %v506
        %v763 = vsub.f32 %v251, %v507
        %v764 = vsub.f32 %v252, %v508
        %v765 = vsub.f32 %v253, %v509
        %v766 = vsub.f32 %v254, %v510
        %v767 = vsub.f32 %v255, %v511
        %v768 = vsub.f32 %v256, %v512
        %v769 = vsub.f32 %v257, %v513
        %v770 = vsub.f32 %v258, %v514
        %v771 = vsub.f32 %v259, %v515
        %v772 = vsub.f32 %v260, %v516
        %v773 = vsub.f32 %v261, %v517
        %v774 = vsub.f32 %v262, %v518
        %v775 = vsub.f32 %v263, %v519
        %v776 = vsub.f32 %v264, %v520
        %v777 = vsub.f32 %v265, %v521
        %v778 = vsub.f32 %v266, %v522
        %v779 = vsub.f32 %v267, %v523
        %v780 = vsub.f32 %v268, %v524
        %v781 = vsub.f32 %v269, %v525
        %v782 = vsub.f32 %v270, %v526
        %v783 = vsub.f32 %v271, %v527
        %v784 = vsub.f32 %v272, %v528
        %v785 = vsub.f32 %v273, %v529
        %v786 = vsub.f32 %v274, %v530
        %v787 = vsub.f32 %v275, %v531
        %v788 = vsub.f32 %v276, %v532
        %v789 = vsub.f32 %v277, %v533
        %v790 = vsub.f32 %v278, %v534
        %v791 = vsub.f32 %v279, %v535
        %v792 = vsub.f32 %v280, %v536
        %v793 = vsub.f32 %v281, %v537
        %v794 = vsub.f32 %v282, %v538
        %v795 = vsub.f32 %v283, %v539
        %v796 = vsub.f32 %v284, %v540
        %v797 = vsub.f32 %v285, %v541
        %v798 = vsub.f32 %v286, %v542
        %v799 = vsub.f32 %v287, %v543
        %v800 = vsub.f32 %v288, %v544
        %v801 = vsub.f32 %v289, %v545
        %v802 = vsub.f32 %v290, %v546
        %v803 = vsub.f32 %v291, %v547
        %v804 = vsub.f32 %v292, %v548
        %v805 = vsub.f32 %v293, %v549
        %v806 = vsub.f32 %v294, %v550
        %v807 = vsub.f32 %v295, %v551
        %v808 = vsub.f32 %v296, %v552
        %v809 = vsub.f32 %v297, %v553
        %v810 = vsub.f32 %v298, %v554
        %v811 = vsub.f32 %v299, %v555
        %v812 = vsub.f32 %v300, %v556
        %v813 = vsub.f32 %v301, %v557
        %v814 = vsub.f32 %v302, %v558
        %v815 = vsub.f32 %v303, %v559
        %v816 = vsub.f32 %v304, %v560
        %v817 = vsub.f32 %v305, %v561
        %v818 = vsub.f32 %v306, %v562
        %v819 = vsub.f32 %v307, %v563
        %v820 = vsub.f32 %v308, %v564
        %v821 = vsub.f32 %v309, %v565
        %v822 = vsub.f32 %v310, %v566
        %v823 = vsub.f32 %v311, %v567
        %v824 = vsub.f32 %v312, %v568
        %v825 = vsub.f32 %v313, %v569
        %v826 = vsub.f32 %v314, %v570
        %v827 = vsub.f32 %v315, %v571
        %v828 = vsub.f32 %v316, %v572
        %v829 = vsub.f32 %v317, %v573
        %v830 = vsub.f32 %v318, %v574
        %v831 = vsub.f32 %v319, %v575
        %v832 = vsub.f32 %v320, %v576
        %v833 = vsub.f32 %v321, %v577
        %v834 = vsub.f32 %v322, %v578
        %v835 = vsub.f32 %v323, %v579
        %v836 = vsub.f32 %v324, %v580
        %v837 = vsub.f32 %v325, %v581
        %v838 = vsub.f32 %v326, %v582
        %v839 = vsub.f32 %v327, %v583
        %v840 = vsub.f32 %v328, %v584
        %v841 = vsub.f32 %v329, %v585
        %v842 = vsub.f32 %v330, %v586
        %v843 = vsub.f32 %v331, %v587
        %v844 = vsub.f32 %v332, %v588
        %v845 = vsub.f32 %v333, %v589
        %v846 = vsub.f32 %v334, %v590
        %v847 = vsub.f32 %v335, %v591
        %v848 = vsub.f32 %v336, %v592
        %v849 = vsub.f32 %v337, %v593
        %v850 = vsub.f32 %v338, %v594
        %v851 = vsub.f32 %v339, %v595
        %v852 = vsub.f32 %v340, %v596
        %v853 = vsub.f32 %v341, %v597
        %v854 = vsub.f32 %v342, %v598
        %v855 = vsub.f32 %v343, %v599
        %v856 = vsub.f32 %v344, %v600
        %v857 = vsub.f32 %v345, %v601
        %v858 = vsub.f32 %v346, %v602
        %v859 = vsub.f32 %v347, %v603
        %v860 = vsub.f32 %v348, %v604
        %v861 = vsub.f32 %v349, %v605
        %v862 = vsub.f32 %v350, %v606
        %v863 = vsub.f32 %v351, %v607
        %v864 = vsub.f32 %v352, %v608
        %v865 = vsub.f32 %v353, %v609
        %v866 = vsub.f32 %v354, %v610
        %v867 = vsub.f32 %v355, %v611
        %v868 = vsub.f32 %v356, %v612
        %v869 = vsub.f32 %v357, %v613
        %v870 = vsub.f32 %v358, %v614
        %v871 = vsub.f32 %v359, %v615
        %v872 = vsub.f32 %v360, %v616
        %v873 = vsub.f32 %v361, %v617
        %v874 = vsub.f32 %v362, %v618
        %v875 = vsub.f32 %v363, %v619
        %v876 = vsub.f32 %v364, %v620
        %v877 = vsub.f32 %v365, %v621
        %v878 = vsub.f32 %v366, %v622
        %v879 = vsub.f32 %v367, %v623
        %v880 = vsub.f32 %v368, %v624
        %v881 = vsub.f32 %v369, %v625
        %v882 = vsub.f32 %v370, %v626
        %v883 = vsub.f32 %v371, %v627
        %v884 = vsub.f32 %v372, %v628
        %v885 = vsub.f32 %v373, %v629
        %v886 = vsub.f32 %v374, %v630
        %v887 = vsub.f32 %v375, %v631
        %v888 = vsub.f32 %v376, %v632
        %v889 = vsub.f32 %v377, %v633
        %v890 = vsub.f32 %v378, %v634
        %v891 = vsub.f32 %v379, %v635
        %v892 = vsub.f32 %v380, %v636
        %v893 = vsub.f32 %v381, %v637
        %v894 = vsub.f32 %v382, %v638
        %v895 = vsub.f32 %v383, %v639
        %v896 = vsub.f32 %v384, %v640
        %v897 = vsub.f32 %v385, %v641
        %v898 = vsub.f32 %v386, %v642
        %v899 = vsub.f32 %v387, %v643
        %v900 = vsub.f32 %v388, %v644
        %v901 = vsub.f32 %v389, %v645
        %v902 = vsub.f32 %v390, %v646
        %v903 = vsub.f32 %v391, %v647
        %v904 = vsub.f32 %v392, %v648
        %v905 = vsub.f32 %v393, %v649
        %v906 = vsub.f32 %v394, %v650
        %v907 = vsub.f32 %v395, %v651
        %v908 = vsub.f32 %v396, %v652
        %v909 = vsub.f32 %v397, %v653
        %v910 = vsub.f32 %v398, %v654
        %v911 = vsub.f32 %v399, %v655
        %v912 = vsub.f32 %v400, %v656
        %v913 = vsub.f32 %v401, %v657
        %v914 = vsub.f32 %v402, %v658
        %v915 = vsub.f32 %v403, %v659
        %v916 = vsub.f32 %v404, %v660
        %v917 = vsub.f32 %v405, %v661
        %v918 = vsub.f32 %v406, %v662
        %v919 = vsub.f32 %v407, %v663
        %v920 = vsub.f32 %v408, %v664
        %v921 = vsub.f32 %v409, %v665
        %v922 = vsub.f32 %v410, %v666
        %v923 = vsub.f32 %v411, %v667
        %v924 = vsub.f32 %v412, %v668
        %v925 = vsub.f32 %v413, %v669
        %v926 = vsub.f32 %v414, %v670
        %v927 = vsub.f32 %v415, %v671
        %v928 = vsub.f32 %v416, %v672
        %v929 = vsub.f32 %v417, %v673
        %v930 = vsub.f32 %v418, %v674
        %v931 = vsub.f32 %v419, %v675
        %v932 = vsub.f32 %v420, %v676
        %v933 = vsub.f32 %v421, %v677
        %v934 = vsub.f32 %v422, %v678
        %v935 = vsub.f32 %v423, %v679
        %v936 = vsub.f32 %v424, %v680
        %v937 = vsub.f32 %v425, %v681
        %v938 = vsub.f32 %v426, %v682
        %v939 = vsub.f32 %v427, %v683
        %v940 = vsub.f32 %v428, %v684
        %v941 = vsub.f32 %v429, %v685
        %v942 = vsub.f32 %v430, %v686
        %v943 = vsub.f32 %v431, %v687
        %v944 = vsub.f32 %v432, %v688
        %v945 = vsub.f32 %v433, %v689
        %v946 = vsub.f32 %v434, %v690
        %v947 = vsub.f32 %v435, %v691
        %v948 = vsub.f32 %v436, %v692
        %v949 = vsub.f32 %v437, %v693
        %v950 = vsub.f32 %v438, %v694
        %v951 = vsub.f32 %v439, %v695
        %v952 = vsub.f32 %v440, %v696
        %v953 = vsub.f32 %v441, %v697
        %v954 = vsub.f32 %v442, %v698
        %v955 = vsub.f32 %v443, %v699
        %v956 = vsub.f32 %v444, %v700
        %v957 = vsub.f32 %v445, %v701
        %v958 = vsub.f32 %v446, %v702
        %v959 = vsub.f32 %v447, %v703
        %v960 = vsub.f32 %v448, %v704
        %v961 = vsub.f32 %v449, %v705
        %v962 = vsub.f32 %v450, %v706
        %v963 = vsub.f32 %v451, %v707
        %v964 = vsub.f32 %v452, %v708
        %v965 = vsub.f32 %v453, %v709
        %v966 = vsub.f32 %v454, %v710
        %v967 = vsub.f32 %v455, %v711
        %v968 = vsub.f32 %v456, %v712
        %v969 = vsub.f32 %v457, %v713
        %v970 = vsub.f32 %v458, %v714
        %v971 = vsub.f32 %v459, %v715
        %v972 = vsub.f32 %v460, %v716
        %v973 = vsub.f32 %v461, %v717
        %v974 = vsub.f32 %v462, %v718
        %v975 = vsub.f32 %v463, %v719
        %v976 = vsub.f32 %v464, %v720
        %v977 = vsub.f32 %v465, %v721
        %v978 = vsub.f32 %v466, %v722
        %v979 = vsub.f32 %v467, %v723
        %v980 = vsub.f32 %v468, %v724
        %v981 = vsub.f32 %v469, %v725
        %v982 = vsub.f32 %v470, %v726
        %v983 = vsub.f32 %v471, %v727
        %v984 = vsub.f32 %v472, %v728
        %v985 = vsub.f32 %v473, %v729
        %v986 = vsub.f32 %v474, %v730
        %v987 = vsub.f32 %v475, %v731
        %v988 = vsub.f32 %v476, %v732
        %v989 = vsub.f32 %v477, %v733
        %v990 = vsub.f32 %v478, %v734
        %v991 = vsub.f32 %v479, %v735
        %v992 = vsub.f32 %v480, %v736
        %v993 = vsub.f32 %v481, %v737
        %v994 = vsub.f32 %v482, %v738
        %v995 = vsub.f32 %v483, %v739
        %v996 = vsub.f32 %v484, %v740
        %v997 = vsub.f32 %v485, %v741
        %v998 = vsub.f32 %v486, %v742
        %v999 = vsub.f32 %v487, %v743
        %v1000 = vsub.f32 %v488, %v744
        %v1001 = vsub.f32 %v489, %v745
        %v1002 = vsub.f32 %v490, %v746
        %v1003 = vsub.f32 %v491, %v747
        %v1004 = vmul.f32 %v748, %v748
        %v1005 = vmul.f32 %v749, %v749
        %v1006 = vmul.f32 %v750, %v750
        %v1007 = vmul.f32 %v751, %v751
        %v1008 = vmul.f32 %v752, %v752
        %v1009 = vmul.f32 %v753, %v753
        %v1010 = vmul.f32 %v754, %v754
        %v1011 = vmul.f32 %v755, %v755
        %v1012 = vmul.f32 %v756, %v756
        %v1013 = vmul.f32 %v757, %v757
        %v1014 = vmul.f32 %v758, %v758
        %v1015 = vmul.f32 %v759, %v759
        %v1016 = vmul.f32 %v760, %v760
        %v1017 = vmul.f32 %v761, %v761
        %v1018 = vmul.f32 %v762, %v762
        %v1019 = vmul.f32 %v763, %v763
        %v1020 = vmul.f32 %v764, %v764
        %v1021 = vmul.f32 %v765, %v765
        %v1022 = vmul.f32 %v766, %v766
        %v1023 = vmul.f32 %v767, %v767
        %v1024 = vmul.f32 %v768, %v768
        %v1025 = vmul.f32 %v769, %v769
        %v1026 = vmul.f32 %v770, %v770
        %v1027 = vmul.f32 %v771, %v771
        %v1028 = vmul.f32 %v772, %v772
        %v1029 = vmul.f32 %v773, %v773
        %v1030 = vmul.f32 %v774, %v774
        %v1031 = vmul.f32 %v775, %v775
        %v1032 = vmul.f32 %v776, %v776
        %v1033 = vmul.f32 %v777, %v777
        %v1034 = vmul.f32 %v778, %v778
        %v1035 = vmul.f32 %v779, %v779
        %v1036 = vmul.f32 %v780, %v780
        %v1037 = vmul.f32 %v781, %v781
        %v1038 = vmul.f32 %v782, %v782
        %v1039 = vmul.f32 %v783, %v783
        %v1040 = vmul.f32 %v784, %v784
        %v1041 = vmul.f32 %v785, %v785
        %v1042 = vmul.f32 %v786, %v786
        %v1043 = vmul.f32 %v787, %v787
        %v1044 = vmul.f32 %v788, %v788
        %v1045 = vmul.f32 %v789, %v789
        %v1046 = vmul.f32 %v790, %v790
        %v1047 = vmul.f32 %v791, %v791
        %v1048 = vmul.f32 %v792, %v792
        %v1049 = vmul.f32 %v793, %v793
        %v1050 = vmul.f32 %v794, %v794
        %v1051 = vmul.f32 %v795, %v795
        %v1052 = vmul.f32 %v796, %v796
        %v1053 = vmul.f32 %v797, %v797
        %v1054 = vmul.f32 %v798, %v798
        %v1055 = vmul.f32 %v799, %v799
        %v1056 = vmul.f32 %v800, %v800
        %v1057 = vmul.f32 %v801, %v801
        %v1058 = vmul.f32 %v802, %v802
        %v1059 = vmul.f32 %v803, %v803
        %v1060 = vmul.f32 %v804, %v804
        %v1061 = vmul.f32 %v805, %v805
        %v1062 = vmul.f32 %v806, %v806
        %v1063 = vmul.f32 %v807, %v807
        %v1064 = vmul.f32 %v808, %v808
        %v1065 = vmul.f32 %v809, %v809
        %v1066 = vmul.f32 %v810, %v810
        %v1067 = vmul.f32 %v811, %v811
        %v1068 = vmul.f32 %v812, %v812
        %v1069 = vmul.f32 %v813, %v813
        %v1070 = vmul.f32 %v814, %v814
        %v1071 = vmul.f32 %v815, %v815
        %v1072 = vmul.f32 %v816, %v816
        %v1073 = vmul.f32 %v817, %v817
        %v1074 = vmul.f32 %v818, %v818
        %v1075 = vmul.f32 %v819, %v819
        %v1076 = vmul.f32 %v820, %v820
        %v1077 = vmul.f32 %v821, %v821
        %v1078 = vmul.f32 %v822, %v822
        %v1079 = vmul.f32 %v823, %v823
        %v1080 = vmul.f32 %v824, %v824
        %v1081 = vmul.f32 %v825, %v825
        %v1082 = vmul.f32 %v826, %v826
        %v1083 = vmul.f32 %v827, %v827
        %v1084 = vmul.f32 %v828, %v828
        %v1085 = vmul.f32 %v829, %v829
        %v1086 = vmul.f32 %v830, %v830
        %v1087 = vmul.f32 %v831, %v831
        %v1088 = vmul.f32 %v832, %v832
        %v1089 = vmul.f32 %v833, %v833
        %v1090 = vmul.f32 %v834, %v834
        %v1091 = vmul.f32 %v835, %v835
        %v1092 = vmul.f32 %v836, %v836
        %v1093 = vmul.f32 %v837, %v837
        %v1094 = vmul.f32 %v838, %v838
        %v1095 = vmul.f32 %v839, %v839
        %v1096 = vmul.f32 %v840, %v840
        %v1097 = vmul.f32 %v841, %v841
        %v1098 = vmul.f32 %v842, %v842
        %v1099 = vmul.f32 %v843, %v843
        %v1100 = vmul.f32 %v844, %v844
        %v1101 = vmul.f32 %v845, %v845
        %v1102 = vmul.f32 %v846, %v846
        %v1103 = vmul.f32 %v847, %v847
        %v1104 = vmul.f32 %v848, %v848
        %v1105 = vmul.f32 %v849, %v849
        %v1106 = vmul.f32 %v850, %v850
        %v1107 = vmul.f32 %v851, %v851
        %v1108 = vmul.f32 %v852, %v852
        %v1109 = vmul.f32 %v853, %v853
        %v1110 = vmul.f32 %v854, %v854
        %v1111 = vmul.f32 %v855, %v855
        %v1112 = vmul.f32 %v856, %v856
        %v1113 = vmul.f32 %v857, %v857
        %v1114 = vmul.f32 %v858, %v858
        %v1115 = vmul.f32 %v859, %v859
        %v1116 = vmul.f32 %v860, %v860
        %v1117 = vmul.f32 %v861, %v861
        %v1118 = vmul.f32 %v862, %v862
        %v1119 = vmul.f32 %v863, %v863
        %v1120 = vmul.f32 %v864, %v864
        %v1121 = vmul.f32 %v865, %v865
        %v1122 = vmul.f32 %v866, %v866
        %v1123 = vmul.f32 %v867, %v867
        %v1124 = vmul.f32 %v868, %v868
        %v1125 = vmul.f32 %v869, %v869
        %v1126 = vmul.f32 %v870, %v870
        %v1127 = vmul.f32 %v871, %v871
        %v1128 = vmul.f32 %v872, %v872
        %v1129 = vmul.f32 %v873, %v873
        %v1130 = vmul.f32 %v874, %v874
        %v1131 = vmul.f32 %v875, %v875
        %v1132 = vmul.f32 %v876, %v876
        %v1133 = vmul.f32 %v877, %v877
        %v1134 = vmul.f32 %v878, %v878
        %v1135 = vmul.f32 %v879, %v879
        %v1136 = vmul.f32 %v880, %v880
        %v1137 = vmul.f32 %v881, %v881
        %v1138 = vmul.f32 %v882, %v882
        %v1139 = vmul.f32 %v883, %v883
        %v1140 = vmul.f32 %v884, %v884
        %v1141 = vmul.f32 %v885, %v885
        %v1142 = vmul.f32 %v886, %v886
        %v1143 = vmul.f32 %v887, %v887
        %v1144 = vmul.f32 %v888, %v888
        %v1145 = vmul.f32 %v889, %v889
        %v1146 = vmul.f32 %v890, %v890
        %v1147 = vmul.f32 %v891, %v891
        %v1148 = vmul.f32 %v892, %v892
        %v1149 = vmul.f32 %v893, %v893
        %v1150 = vmul.f32 %v894, %v894
        %v1151 = vmul.f32 %v895, %v895
        %v1152 = vmul.f32 %v896, %v896
        %v1153 = vmul.f32 %v897, %v897
        %v1154 = vmul.f32 %v898, %v898
        %v1155 = vmul.f32 %v899, %v899
        %v1156 = vmul.f32 %v900, %v900
        %v1157 = vmul.f32 %v901, %v901
        %v1158 = vmul.f32 %v902, %v902
        %v1159 = vmul.f32 %v903, %v903
        %v1160 = vmul.f32 %v904, %v904
        %v1161 = vmul.f32 %v905, %v905
        %v1162 = vmul.f32 %v906, %v906
        %v1163 = vmul.f32 %v907, %v907
        %v1164 = vmul.f32 %v908, %v908
        %v1165 = vmul.f32 %v909, %v909
        %v1166 = vmul.f32 %v910, %v910
        %v1167 = vmul.f32 %v911, %v911
        %v1168 = vmul.f32 %v912, %v912
        %v1169 = vmul.f32 %v913, %v913
        %v1170 = vmul.f32 %v914, %v914
        %v1171 = vmul.f32 %v915, %v915
        %v1172 = vmul.f32 %v916, %v916
        %v1173 = vmul.f32 %v917, %v917
        %v1174 = vmul.f32 %v918, %v918
        %v1175 = vmul.f32 %v919, %v919
        %v1176 = vmul.f32 %v920, %v920
        %v1177 = vmul.f32 %v921, %v921
        %v1178 = vmul.f32 %v922, %v922
        %v1179 = vmul.f32 %v923, %v923
        %v1180 = vmul.f32 %v924, %v924
        %v1181 = vmul.f32 %v925, %v925
        %v1182 = vmul.f32 %v926, %v926
        %v1183 = vmul.f32 %v927, %v927
        %v1184 = vmul.f32 %v928, %v928
        %v1185 = vmul.f32 %v929, %v929
        %v1186 = vmul.f32 %v930, %v930
        %v1187 = vmul.f32 %v931, %v931
        %v1188 = vmul.f32 %v932, %v932
        %v1189 = vmul.f32 %v933, %v933
        %v1190 = vmul.f32 %v934, %v934
        %v1191 = vmul.f32 %v935, %v935
        %v1192 = vmul.f32 %v936, %v936
        %v1193 = vmul.f32 %v937, %v937
        %v1194 = vmul.f32 %v938, %v938
        %v1195 = vmul.f32 %v939, %v939
        %v1196 = vmul.f32 %v940, %v940
        %v1197 = vmul.f32 %v941, %v941
        %v1198 = vmul.f32 %v942, %v942
        %v1199 = vmul.f32 %v943, %v943
        %v1200 = vmul.f32 %v944, %v944
        %v1201 = vmul.f32 %v945, %v945
        %v1202 = vmul.f32 %v946, %v946
        %v1203 = vmul.f32 %v947, %v947
        %v1204 = vmul.f32 %v948, %v948
        %v1205 = vmul.f32 %v949, %v949
        %v1206 = vmul.f32 %v950, %v950
        %v1207 = vmul.f32 %v951, %v951
        %v1208 = vmul.f32 %v952, %v952
        %v1209 = vmul.f32 %v953, %v953
        %v1210 = vmul.f32 %v954, %v954
        %v1211 = vmul.f32 %v955, %v955
        %v1212 = vmul.f32 %v956, %v956
        %v1213 = vmul.f32 %v957, %v957
        %v1214 = vmul.f32 %v958, %v958
        %v1215 = vmul.f32 %v959, %v959
        %v1216 = vmul.f32 %v960, %v960
        %v1217 = vmul.f32 %v961, %v961
        %v1218 = vmul.f32 %v962, %v962
        %v1219 = vmul.f32 %v963, %v963
        %v1220 = vmul.f32 %v964, %v964
        %v1221 = vmul.f32 %v965, %v965
        %v1222 = vmul.f32 %v966, %v966
        %v1223 = vmul.f32 %v967, %v967
        %v1224 = vmul.f32 %v968, %v968
        %v1225 = vmul.f32 %v969, %v969
        %v1226 = vmul.f32 %v970, %v970
        %v1227 = vmul.f32 %v971, %v971
        %v1228 = vmul.f32 %v972, %v972
        %v1229 = vmul.f32 %v973, %v973
        %v1230 = vmul.f32 %v974, %v974
        %v1231 = vmul.f32 %v975, %v975
        %v1232 = vmul.f32 %v976, %v976
        %v1233 = vmul.f32 %v977, %v977
        %v1234 = vmul.f32 %v978, %v978
        %v1235 = vmul.f32 %v979, %v979
        %v1236 = vmul.f32 %v980, %v980
        %v1237 = vmul.f32 %v981, %v981
        %v1238 = vmul.f32 %v982, %v982
        %v1239 = vmul.f32 %v983, %v983
        %v1240 = vmul.f32 %v984, %v984
        %v1241 = vmul.f32 %v985, %v985
        %v1242 = vmul.f32 %v986, %v986
        %v1243 = vmul.f32 %v987, %v987
        %v1244 = vmul.f32 %v988, %v988
        %v1245 = vmul.f32 %v989, %v989
        %v1246 = vmul.f32 %v990, %v990
        %v1247 = vmul.f32 %v991, %v991
        %v1248 = vmul.f32 %v992, %v992
        %v1249 = vmul.f32 %v993, %v993
        %v1250 = vmul.f32 %v994, %v994
        %v1251 = vmul.f32 %v995, %v995
        %v1252 = vmul.f32 %v996, %v996
        %v1253 = vmul.f32 %v997, %v997
        %v1254 = vmul.f32 %v998, %v998
        %v1255 = vmul.f32 %v999, %v999
        %v1256 = vmul.f32 %v1000, %v1000
        %v1257 = vmul.f32 %v1001, %v1001
        %v1258 = vmul.f32 %v1002, %v1002
        %v1259 = vmul.f32 %v1003, %v1003
        %p1260 = scmp.lt.s32.totalorder %s230, 1
        // Predicated region
        $region41: #{tpu_custom_call.1} parent=27 // pred_check
          %p1261 = pneg %p1260
        $region42: #{tpu_custom_call.1} parent=27 // pred_check_branch
          %1263 = sbr.rel (%p1261) target = $region44
        $region43: #{tpu_custom_call.1} parent=27 // pred_region
          %v1264 = vld [vmem:[#allocation2] sm:$0xff]
          %v1265 = vadd.f32 %v1004, %v1005
          %v1266 = vadd.f32 %v1265, %v1006
          %v1267 = vadd.f32 %v1266, %v1007
          %v1268 = vadd.f32 %v1267, %v1008
          %v1269 = vadd.f32 %v1268, %v1009
          %v1270 = vadd.f32 %v1269, %v1010
          %v1271 = vadd.f32 %v1270, %v1011
          %v1272 = vadd.f32 %v1271, %v1012
          %v1273 = vadd.f32 %v1272, %v1013
          %v1274 = vadd.f32 %v1273, %v1014
          %v1275 = vadd.f32 %v1274, %v1015
          %v1276 = vadd.f32 %v1275, %v1016
          %v1277 = vadd.f32 %v1276, %v1017
          %v1278 = vadd.f32 %v1277, %v1018
          %v1279 = vadd.f32 %v1278, %v1019
          %v1280 = vadd.f32 %v1279, %v1020
          %v1281 = vadd.f32 %v1280, %v1021
          %v1282 = vadd.f32 %v1281, %v1022
          %v1283 = vadd.f32 %v1282, %v1023
          %v1284 = vadd.f32 %v1283, %v1024
          %v1285 = vadd.f32 %v1284, %v1025
          %v1286 = vadd.f32 %v1285, %v1026
          %v1287 = vadd.f32 %v1286, %v1027
          %v1288 = vadd.f32 %v1287, %v1028
          %v1289 = vadd.f32 %v1288, %v1029
          %v1290 = vadd.f32 %v1289, %v1030
          %v1291 = vadd.f32 %v1290, %v1031
          %v1292 = vadd.f32 %v1291, %v1032
          %v1293 = vadd.f32 %v1292, %v1033
          %v1294 = vadd.f32 %v1293, %v1034
          %v1295 = vadd.f32 %v1294, %v1035
          %v1296 = vadd.f32 %v1295, %v1036
          %v1297 = vadd.f32 %v1296, %v1037
          %v1298 = vadd.f32 %v1297, %v1038
          %v1299 = vadd.f32 %v1298, %v1039
          %v1300 = vadd.f32 %v1299, %v1040
          %v1301 = vadd.f32 %v1300, %v1041
          %v1302 = vadd.f32 %v1301, %v1042
          %v1303 = vadd.f32 %v1302, %v1043
          %v1304 = vadd.f32 %v1303, %v1044
          %v1305 = vadd.f32 %v1304, %v1045
          %v1306 = vadd.f32 %v1305, %v1046
          %v1307 = vadd.f32 %v1306, %v1047
          %v1308 = vadd.f32 %v1307, %v1048
          %v1309 = vadd.f32 %v1308, %v1049
          %v1310 = vadd.f32 %v1309, %v1050
          %v1311 = vadd.f32 %v1310, %v1051
          %v1312 = vadd.f32 %v1311, %v1052
          %v1313 = vadd.f32 %v1312, %v1053
          %v1314 = vadd.f32 %v1313, %v1054
          %v1315 = vadd.f32 %v1314, %v1055
          %v1316 = vadd.f32 %v1315, %v1056
          %v1317 = vadd.f32 %v1316, %v1057
          %v1318 = vadd.f32 %v1317, %v1058
          %v1319 = vadd.f32 %v1318, %v1059
          %v1320 = vadd.f32 %v1319, %v1060
          %v1321 = vadd.f32 %v1320, %v1061
          %v1322 = vadd.f32 %v1321, %v1062
          %v1323 = vadd.f32 %v1322, %v1063
          %v1324 = vadd.f32 %v1323, %v1064
          %v1325 = vadd.f32 %v1324, %v1065
          %v1326 = vadd.f32 %v1325, %v1066
          %v1327 = vadd.f32 %v1326, %v1067
          %v1328 = vadd.f32 %v1327, %v1068
          %v1329 = vadd.f32 %v1328, %v1069
          %v1330 = vadd.f32 %v1329, %v1070
          %v1331 = vadd.f32 %v1330, %v1071
          %v1332 = vadd.f32 %v1331, %v1072
          %v1333 = vadd.f32 %v1332, %v1073
          %v1334 = vadd.f32 %v1333, %v1074
          %v1335 = vadd.f32 %v1334, %v1075
          %v1336 = vadd.f32 %v1335, %v1076
          %v1337 = vadd.f32 %v1336, %v1077
          %v1338 = vadd.f32 %v1337, %v1078
          %v1339 = vadd.f32 %v1338, %v1079
          %v1340 = vadd.f32 %v1339, %v1080
          %v1341 = vadd.f32 %v1340, %v1081
          %v1342 = vadd.f32 %v1341, %v1082
          %v1343 = vadd.f32 %v1342, %v1083
          %v1344 = vadd.f32 %v1343, %v1084
          %v1345 = vadd.f32 %v1344, %v1085
          %v1346 = vadd.f32 %v1345, %v1086
          %v1347 = vadd.f32 %v1346, %v1087
          %v1348 = vadd.f32 %v1347, %v1088
          %v1349 = vadd.f32 %v1348, %v1089
          %v1350 = vadd.f32 %v1349, %v1090
          %v1351 = vadd.f32 %v1350, %v1091
          %v1352 = vadd.f32 %v1351, %v1092
          %v1353 = vadd.f32 %v1352, %v1093
          %v1354 = vadd.f32 %v1353, %v1094
          %v1355 = vadd.f32 %v1354, %v1095
          %v1356 = vadd.f32 %v1355, %v1096
          %v1357 = vadd.f32 %v1356, %v1097
          %v1358 = vadd.f32 %v1357, %v1098
          %v1359 = vadd.f32 %v1358, %v1099
          %v1360 = vadd.f32 %v1359, %v1100
          %v1361 = vadd.f32 %v1360, %v1101
          %v1362 = vadd.f32 %v1361, %v1102
          %v1363 = vadd.f32 %v1362, %v1103
          %v1364 = vadd.f32 %v1363, %v1104
          %v1365 = vadd.f32 %v1364, %v1105
          %v1366 = vadd.f32 %v1365, %v1106
          %v1367 = vadd.f32 %v1366, %v1107
          %v1368 = vadd.f32 %v1367, %v1108
          %v1369 = vadd.f32 %v1368, %v1109
          %v1370 = vadd.f32 %v1369, %v1110
          %v1371 = vadd.f32 %v1370, %v1111
          %v1372 = vadd.f32 %v1371, %v1112
          %v1373 = vadd.f32 %v1372, %v1113
          %v1374 = vadd.f32 %v1373, %v1114
          %v1375 = vadd.f32 %v1374, %v1115
          %v1376 = vadd.f32 %v1375, %v1116
          %v1377 = vadd.f32 %v1376, %v1117
          %v1378 = vadd.f32 %v1377, %v1118
          %v1379 = vadd.f32 %v1378, %v1119
          %v1380 = vadd.f32 %v1379, %v1120
          %v1381 = vadd.f32 %v1380, %v1121
          %v1382 = vadd.f32 %v1381, %v1122
          %v1383 = vadd.f32 %v1382, %v1123
          %v1384 = vadd.f32 %v1383, %v1124
          %v1385 = vadd.f32 %v1384, %v1125
          %v1386 = vadd.f32 %v1385, %v1126
          %v1387 = vadd.f32 %v1386, %v1127
          %v1388 = vadd.f32 %v1387, %v1128
          %v1389 = vadd.f32 %v1388, %v1129
          %v1390 = vadd.f32 %v1389, %v1130
          %v1391 = vadd.f32 %v1390, %v1131
          %v1392 = vadd.f32 %v1391, %v1132
          %v1393 = vadd.f32 %v1392, %v1133
          %v1394 = vadd.f32 %v1393, %v1134
          %v1395 = vadd.f32 %v1394, %v1135
          %v1396 = vadd.f32 %v1395, %v1136
          %v1397 = vadd.f32 %v1396, %v1137
          %v1398 = vadd.f32 %v1397, %v1138
          %v1399 = vadd.f32 %v1398, %v1139
          %v1400 = vadd.f32 %v1399, %v1140
          %v1401 = vadd.f32 %v1400, %v1141
          %v1402 = vadd.f32 %v1401, %v1142
          %v1403 = vadd.f32 %v1402, %v1143
          %v1404 = vadd.f32 %v1403, %v1144
          %v1405 = vadd.f32 %v1404, %v1145
          %v1406 = vadd.f32 %v1405, %v1146
          %v1407 = vadd.f32 %v1406, %v1147
          %v1408 = vadd.f32 %v1407, %v1148
          %v1409 = vadd.f32 %v1408, %v1149
          %v1410 = vadd.f32 %v1409, %v1150
          %v1411 = vadd.f32 %v1410, %v1151
          %v1412 = vadd.f32 %v1411, %v1152
          %v1413 = vadd.f32 %v1412, %v1153
          %v1414 = vadd.f32 %v1413, %v1154
          %v1415 = vadd.f32 %v1414, %v1155
          %v1416 = vadd.f32 %v1415, %v1156
          %v1417 = vadd.f32 %v1416, %v1157
          %v1418 = vadd.f32 %v1417, %v1158
          %v1419 = vadd.f32 %v1418, %v1159
          %v1420 = vadd.f32 %v1419, %v1160
          %v1421 = vadd.f32 %v1420, %v1161
          %v1422 = vadd.f32 %v1421, %v1162
          %v1423 = vadd.f32 %v1422, %v1163
          %v1424 = vadd.f32 %v1423, %v1164
          %v1425 = vadd.f32 %v1424, %v1165
          %v1426 = vadd.f32 %v1425, %v1166
          %v1427 = vadd.f32 %v1426, %v1167
          %v1428 = vadd.f32 %v1427, %v1168
          %v1429 = vadd.f32 %v1428, %v1169
          %v1430 = vadd.f32 %v1429, %v1170
          %v1431 = vadd.f32 %v1430, %v1171
          %v1432 = vadd.f32 %v1431, %v1172
          %v1433 = vadd.f32 %v1432, %v1173
          %v1434 = vadd.f32 %v1433, %v1174
          %v1435 = vadd.f32 %v1434, %v1175
          %v1436 = vadd.f32 %v1435, %v1176
          %v1437 = vadd.f32 %v1436, %v1177
          %v1438 = vadd.f32 %v1437, %v1178
          %v1439 = vadd.f32 %v1438, %v1179
          %v1440 = vadd.f32 %v1439, %v1180
          %v1441 = vadd.f32 %v1440, %v1181
          %v1442 = vadd.f32 %v1441, %v1182
          %v1443 = vadd.f32 %v1442, %v1183
          %v1444 = vadd.f32 %v1443, %v1184
          %v1445 = vadd.f32 %v1444, %v1185
          %v1446 = vadd.f32 %v1445, %v1186
          %v1447 = vadd.f32 %v1446, %v1187
          %v1448 = vadd.f32 %v1447, %v1188
          %v1449 = vadd.f32 %v1448, %v1189
          %v1450 = vadd.f32 %v1449, %v1190
          %v1451 = vadd.f32 %v1450, %v1191
          %v1452 = vadd.f32 %v1451, %v1192
          %v1453 = vadd.f32 %v1452, %v1193
          %v1454 = vadd.f32 %v1453, %v1194
          %v1455 = vadd.f32 %v1454, %v1195
          %v1456 = vadd.f32 %v1455, %v1196
          %v1457 = vadd.f32 %v1456, %v1197
          %v1458 = vadd.f32 %v1457, %v1198
          %v1459 = vadd.f32 %v1458, %v1199
          %v1460 = vadd.f32 %v1459, %v1200
          %v1461 = vadd.f32 %v1460, %v1201
          %v1462 = vadd.f32 %v1461, %v1202
          %v1463 = vadd.f32 %v1462, %v1203
          %v1464 = vadd.f32 %v1463, %v1204
          %v1465 = vadd.f32 %v1464, %v1205
          %v1466 = vadd.f32 %v1465, %v1206
          %v1467 = vadd.f32 %v1466, %v1207
          %v1468 = vadd.f32 %v1467, %v1208
          %v1469 = vadd.f32 %v1468, %v1209
          %v1470 = vadd.f32 %v1469, %v1210
          %v1471 = vadd.f32 %v1470, %v1211
          %v1472 = vadd.f32 %v1471, %v1212
          %v1473 = vadd.f32 %v1472, %v1213
          %v1474 = vadd.f32 %v1473, %v1214
          %v1475 = vadd.f32 %v1474, %v1215
          %v1476 = vadd.f32 %v1475, %v1216
          %v1477 = vadd.f32 %v1476, %v1217
          %v1478 = vadd.f32 %v1477, %v1218
          %v1479 = vadd.f32 %v1478, %v1219
          %v1480 = vadd.f32 %v1479, %v1220
          %v1481 = vadd.f32 %v1480, %v1221
          %v1482 = vadd.f32 %v1481, %v1222
          %v1483 = vadd.f32 %v1482, %v1223
          %v1484 = vadd.f32 %v1483, %v1224
          %v1485 = vadd.f32 %v1484, %v1225
          %v1486 = vadd.f32 %v1485, %v1226
          %v1487 = vadd.f32 %v1486, %v1227
          %v1488 = vadd.f32 %v1487, %v1228
          %v1489 = vadd.f32 %v1488, %v1229
          %v1490 = vadd.f32 %v1489, %v1230
          %v1491 = vadd.f32 %v1490, %v1231
          %v1492 = vadd.f32 %v1491, %v1232
          %v1493 = vadd.f32 %v1492, %v1233
          %v1494 = vadd.f32 %v1493, %v1234
          %v1495 = vadd.f32 %v1494, %v1235
          %v1496 = vadd.f32 %v1495, %v1236
          %v1497 = vadd.f32 %v1496, %v1237
          %v1498 = vadd.f32 %v1497, %v1238
          %v1499 = vadd.f32 %v1498, %v1239
          %v1500 = vadd.f32 %v1499, %v1240
          %v1501 = vadd.f32 %v1500, %v1241
          %v1502 = vadd.f32 %v1501, %v1242
          %v1503 = vadd.f32 %v1502, %v1243
          %v1504 = vadd.f32 %v1503, %v1244
          %v1505 = vadd.f32 %v1504, %v1245
          %v1506 = vadd.f32 %v1505, %v1246
          %v1507 = vadd.f32 %v1506, %v1247
          %v1508 = vadd.f32 %v1507, %v1248
          %v1509 = vadd.f32 %v1508, %v1249
          %v1510 = vadd.f32 %v1509, %v1250
          %v1511 = vadd.f32 %v1510, %v1251
          %v1512 = vadd.f32 %v1511, %v1252
          %v1513 = vadd.f32 %v1512, %v1253
          %v1514 = vadd.f32 %v1513, %v1254
          %v1515 = vadd.f32 %v1514, %v1255
          %v1516 = vadd.f32 %v1515, %v1256
          %v1517 = vadd.f32 %v1516, %v1257
          %v1518 = vadd.f32 %v1517, %v1258
          %v1519 = vadd.f32 %v1518, %v1259
          %v1520 = vadd.f32 %v1264, %v1519
          %1521 = vst [vmem:[#allocation2] sm:$0xff] %v1520
        $region44: #{tpu_custom_call.1} parent=27 // pred_fallthru
          _
        %p1522 = scmp.ge.s32.totalorder %s230, 1
        // Predicated region
        $region45: #{tpu_custom_call.1} parent=27 // pred_check
          %p1523 = pneg %p1522
        $region46: #{tpu_custom_call.1} parent=27 // pred_check_branch
          %1525 = sbr.rel (%p1523) target = $region48
        $region47: #{tpu_custom_call.1} parent=27 // pred_region
          %s1526 = smul.u32 %s230, 256
          %v1527 = vstv %s1526
          %v1528 = vadd.s32 %v1527, 1
          %v1529 = vadd.s32 %v1527, 2
          %v1530 = vadd.s32 %v1527, 3
          %v1531 = vadd.s32 %v1527, 4
          %v1532 = vadd.s32 %v1527, 5
          %v1533 = vadd.s32 %v1527, 6
          %v1534 = vadd.s32 %v1527, 7
          %v1535 = vadd.s32 %v1527, 8
          %v1536 = vadd.s32 %v1527, 9
          %v1537 = vadd.s32 %v1527, 10
          %v1538 = vadd.s32 %v1527, 11
          %v1539 = vadd.s32 %v1527, 12
          %v1540 = vadd.s32 %v1527, 13
          %v1541 = vadd.s32 %v1527, 14
          %v1542 = vadd.s32 %v1527, 15
          %v1543 = vadd.s32 %v1527, 16
          %v1544 = vadd.s32 %v1527, 17
          %v1545 = vadd.s32 %v1527, 18
          %v1546 = vadd.s32 %v1527, 19
          %v1547 = vadd.s32 %v1527, 20
          %v1548 = vadd.s32 %v1527, 21
          %v1549 = vadd.s32 %v1527, 22
          %v1550 = vadd.s32 %v1527, 23
          %v1551 = vadd.s32 %v1527, 24
          %v1552 = vadd.s32 %v1527, 25
          %v1553 = vadd.s32 %v1527, 26
          %v1554 = vadd.s32 %v1527, 27
          %v1555 = vadd.s32 %v1527, 28
          %v1556 = vadd.s32 %v1527, 29
          %v1557 = vadd.s32 %v1527, 30
          %v1558 = vadd.s32 %v1527, 31
          %v1559 = vadd.s32 %v1527, 32
          %v1560 = vadd.s32 %v1527, 33
          %v1561 = vadd.s32 %v1527, 34
          %v1562 = vadd.s32 %v1527, 35
          %v1563 = vadd.s32 %v1527, 36
          %v1564 = vadd.s32 %v1527, 37
          %v1565 = vadd.s32 %v1527, 38
          %v1566 = vadd.s32 %v1527, 39
          %v1567 = vadd.s32 %v1527, 40
          %v1568 = vadd.s32 %v1527, 41
          %v1569 = vadd.s32 %v1527, 42
          %v1570 = vadd.s32 %v1527, 43
          %v1571 = vadd.s32 %v1527, 44
          %v1572 = vadd.s32 %v1527, 45
          %v1573 = vadd.s32 %v1527, 46
          %v1574 = vadd.s32 %v1527, 47
          %v1575 = vadd.s32 %v1527, 48
          %v1576 = vadd.s32 %v1527, 49
          %v1577 = vadd.s32 %v1527, 50
          %v1578 = vadd.s32 %v1527, 51
          %v1579 = vadd.s32 %v1527, 52
          %v1580 = vadd.s32 %v1527, 53
          %v1581 = vadd.s32 %v1527, 54
          %v1582 = vadd.s32 %v1527, 55
          %v1583 = vadd.s32 %v1527, 56
          %v1584 = vadd.s32 %v1527, 57
          %v1585 = vadd.s32 %v1527, 58
          %v1586 = vadd.s32 %v1527, 59
          %v1587 = vadd.s32 %v1527, 60
          %v1588 = vadd.s32 %v1527, 61
          %v1589 = vadd.s32 %v1527, 62
          %v1590 = vadd.s32 %v1527, 63
          %v1591 = vadd.s32 %v1527, 64
          %v1592 = vadd.s32 %v1527, 65
          %v1593 = vadd.s32 %v1527, 66
          %v1594 = vadd.s32 %v1527, 67
          %v1595 = vadd.s32 %v1527, 68
          %v1596 = vadd.s32 %v1527, 69
          %v1597 = vadd.s32 %v1527, 70
          %v1598 = vadd.s32 %v1527, 71
          %v1599 = vadd.s32 %v1527, 72
          %v1600 = vadd.s32 %v1527, 73
          %v1601 = vadd.s32 %v1527, 74
          %v1602 = vadd.s32 %v1527, 75
          %v1603 = vadd.s32 %v1527, 76
          %v1604 = vadd.s32 %v1527, 77
          %v1605 = vadd.s32 %v1527, 78
          %v1606 = vadd.s32 %v1527, 79
          %v1607 = vadd.s32 %v1527, 80
          %v1608 = vadd.s32 %v1527, 81
          %v1609 = vadd.s32 %v1527, 82
          %v1610 = vadd.s32 %v1527, 83
          %v1611 = vadd.s32 %v1527, 84
          %v1612 = vadd.s32 %v1527, 85
          %v1613 = vadd.s32 %v1527, 86
          %v1614 = vadd.s32 %v1527, 87
          %v1615 = vadd.s32 %v1527, 88
          %v1616 = vadd.s32 %v1527, 89
          %v1617 = vadd.s32 %v1527, 90
          %v1618 = vadd.s32 %v1527, 91
          %v1619 = vadd.s32 %v1527, 92
          %v1620 = vadd.s32 %v1527, 93
          %v1621 = vadd.s32 %v1527, 94
          %v1622 = vadd.s32 %v1527, 95
          %v1623 = vadd.s32 %v1527, 96
          %v1624 = vadd.s32 %v1527, 97
          %v1625 = vadd.s32 %v1527, 98
          %v1626 = vadd.s32 %v1527, 99
          %v1627 = vadd.s32 %v1527, 100
          %v1628 = vadd.s32 %v1527, 101
          %v1629 = vadd.s32 %v1527, 102
          %v1630 = vadd.s32 %v1527, 103
          %v1631 = vadd.s32 %v1527, 104
          %v1632 = vadd.s32 %v1527, 105
          %v1633 = vadd.s32 %v1527, 106
          %v1634 = vadd.s32 %v1527, 107
          %v1635 = vadd.s32 %v1527, 108
          %v1636 = vadd.s32 %v1527, 109
          %v1637 = vadd.s32 %v1527, 110
          %v1638 = vadd.s32 %v1527, 111
          %v1639 = vadd.s32 %v1527, 112
          %v1640 = vadd.s32 %v1527, 113
          %v1641 = vadd.s32 %v1527, 114
          %v1642 = vadd.s32 %v1527, 115
          %v1643 = vadd.s32 %v1527, 116
          %v1644 = vadd.s32 %v1527, 117
          %v1645 = vadd.s32 %v1527, 118
          %v1646 = vadd.s32 %v1527, 119
          %v1647 = vadd.s32 %v1527, 120
          %v1648 = vadd.s32 %v1527, 121
          %v1649 = vadd.s32 %v1527, 122
          %v1650 = vadd.s32 %v1527, 123
          %v1651 = vadd.s32 %v1527, 124
          %v1652 = vadd.s32 %v1527, 125
          %v1653 = vadd.s32 %v1527, 126
          %v1654 = vadd.s32 %v1527, 127
          %v1655 = vadd.s32 %v1527, 128
          %v1656 = vadd.s32 %v1527, 129
          %v1657 = vadd.s32 %v1527, 130
          %v1658 = vadd.s32 %v1527, 131
          %v1659 = vadd.s32 %v1527, 132
          %v1660 = vadd.s32 %v1527, 133
          %v1661 = vadd.s32 %v1527, 134
          %v1662 = vadd.s32 %v1527, 135
          %v1663 = vadd.s32 %v1527, 136
          %v1664 = vadd.s32 %v1527, 137
          %v1665 = vadd.s32 %v1527, 138
          %v1666 = vadd.s32 %v1527, 139
          %v1667 = vadd.s32 %v1527, 140
          %v1668 = vadd.s32 %v1527, 141
          %v1669 = vadd.s32 %v1527, 142
          %v1670 = vadd.s32 %v1527, 143
          %v1671 = vadd.s32 %v1527, 144
          %v1672 = vadd.s32 %v1527, 145
          %v1673 = vadd.s32 %v1527, 146
          %v1674 = vadd.s32 %v1527, 147
          %v1675 = vadd.s32 %v1527, 148
          %v1676 = vadd.s32 %v1527, 149
          %v1677 = vadd.s32 %v1527, 150
          %v1678 = vadd.s32 %v1527, 151
          %v1679 = vadd.s32 %v1527, 152
          %v1680 = vadd.s32 %v1527, 153
          %v1681 = vadd.s32 %v1527, 154
          %v1682 = vadd.s32 %v1527, 155
          %v1683 = vadd.s32 %v1527, 156
          %v1684 = vadd.s32 %v1527, 157
          %v1685 = vadd.s32 %v1527, 158
          %v1686 = vadd.s32 %v1527, 159
          %v1687 = vadd.s32 %v1527, 160
          %v1688 = vadd.s32 %v1527, 161
          %v1689 = vadd.s32 %v1527, 162
          %v1690 = vadd.s32 %v1527, 163
          %v1691 = vadd.s32 %v1527, 164
          %v1692 = vadd.s32 %v1527, 165
          %v1693 = vadd.s32 %v1527, 166
          %v1694 = vadd.s32 %v1527, 167
          %v1695 = vadd.s32 %v1527, 168
          %v1696 = vadd.s32 %v1527, 169
          %v1697 = vadd.s32 %v1527, 170
          %v1698 = vadd.s32 %v1527, 171
          %v1699 = vadd.s32 %v1527, 172
          %v1700 = vadd.s32 %v1527, 173
          %v1701 = vadd.s32 %v1527, 174
          %v1702 = vadd.s32 %v1527, 175
          %v1703 = vadd.s32 %v1527, 176
          %v1704 = vadd.s32 %v1527, 177
          %v1705 = vadd.s32 %v1527, 178
          %v1706 = vadd.s32 %v1527, 179
          %v1707 = vadd.s32 %v1527, 180
          %v1708 = vadd.s32 %v1527, 181
          %v1709 = vadd.s32 %v1527, 182
          %v1710 = vadd.s32 %v1527, 183
          %v1711 = vadd.s32 %v1527, 184
          %v1712 = vadd.s32 %v1527, 185
          %v1713 = vadd.s32 %v1527, 186
          %v1714 = vadd.s32 %v1527, 187
          %v1715 = vadd.s32 %v1527, 188
          %v1716 = vadd.s32 %v1527, 189
          %v1717 = vadd.s32 %v1527, 190
          %v1718 = vadd.s32 %v1527, 191
          %v1719 = vadd.s32 %v1527, 192
          %v1720 = vadd.s32 %v1527, 193
          %v1721 = vadd.s32 %v1527, 194
          %v1722 = vadd.s32 %v1527, 195
          %v1723 = vadd.s32 %v1527, 196
          %v1724 = vadd.s32 %v1527, 197
          %v1725 = vadd.s32 %v1527, 198
          %v1726 = vadd.s32 %v1527, 199
          %v1727 = vadd.s32 %v1527, 200
          %v1728 = vadd.s32 %v1527, 201
          %v1729 = vadd.s32 %v1527, 202
          %v1730 = vadd.s32 %v1527, 203
          %v1731 = vadd.s32 %v1527, 204
          %v1732 = vadd.s32 %v1527, 205
          %v1733 = vadd.s32 %v1527, 206
          %v1734 = vadd.s32 %v1527, 207
          %v1735 = vadd.s32 %v1527, 208
          %v1736 = vadd.s32 %v1527, 209
          %v1737 = vadd.s32 %v1527, 210
          %v1738 = vadd.s32 %v1527, 211
          %v1739 = vadd.s32 %v1527, 212
          %v1740 = vadd.s32 %v1527, 213
          %v1741 = vadd.s32 %v1527, 214
          %v1742 = vadd.s32 %v1527, 215
          %v1743 = vadd.s32 %v1527, 216
          %v1744 = vadd.s32 %v1527, 217
          %v1745 = vadd.s32 %v1527, 218
          %v1746 = vadd.s32 %v1527, 219
          %v1747 = vadd.s32 %v1527, 220
          %v1748 = vadd.s32 %v1527, 221
          %v1749 = vadd.s32 %v1527, 222
          %v1750 = vadd.s32 %v1527, 223
          %v1751 = vadd.s32 %v1527, 224
          %v1752 = vadd.s32 %v1527, 225
          %v1753 = vadd.s32 %v1527, 226
          %v1754 = vadd.s32 %v1527, 227
          %v1755 = vadd.s32 %v1527, 228
          %v1756 = vadd.s32 %v1527, 229
          %v1757 = vadd.s32 %v1527, 230
          %v1758 = vadd.s32 %v1527, 231
          %v1759 = vadd.s32 %v1527, 232
          %v1760 = vadd.s32 %v1527, 233
          %v1761 = vadd.s32 %v1527, 234
          %v1762 = vadd.s32 %v1527, 235
          %v1763 = vadd.s32 %v1527, 236
          %v1764 = vadd.s32 %v1527, 237
          %v1765 = vadd.s32 %v1527, 238
          %v1766 = vadd.s32 %v1527, 239
          %v1767 = vadd.s32 %v1527, 240
          %v1768 = vadd.s32 %v1527, 241
          %v1769 = vadd.s32 %v1527, 242
          %v1770 = vadd.s32 %v1527, 243
          %v1771 = vadd.s32 %v1527, 244
          %v1772 = vadd.s32 %v1527, 245
          %v1773 = vadd.s32 %v1527, 246
          %v1774 = vadd.s32 %v1527, 247
          %v1775 = vadd.s32 %v1527, 248
          %v1776 = vadd.s32 %v1527, 249
          %v1777 = vadd.s32 %v1527, 250
          %v1778 = vadd.s32 %v1527, 251
          %v1779 = vadd.s32 %v1527, 252
          %v1780 = vadd.s32 %v1527, 253
          %v1781 = vadd.s32 %v1527, 254
          %v1782 = vadd.s32 %v1527, 255
          %vm1783 = vcmp.lt.s32.totalorder %v1527, 257
          %vm1784 = vcmp.lt.s32.totalorder %v1528, 257
          %vm1785 = vcmp.lt.s32.totalorder %v1529, 257
          %vm1786 = vcmp.lt.s32.totalorder %v1530, 257
          %vm1787 = vcmp.lt.s32.totalorder %v1531, 257
          %vm1788 = vcmp.lt.s32.totalorder %v1532, 257
          %vm1789 = vcmp.lt.s32.totalorder %v1533, 257
          %vm1790 = vcmp.lt.s32.totalorder %v1534, 257
          %vm1791 = vcmp.lt.s32.totalorder %v1535, 257
          %vm1792 = vcmp.lt.s32.totalorder %v1536, 257
          %vm1793 = vcmp.lt.s32.totalorder %v1537, 257
          %vm1794 = vcmp.lt.s32.totalorder %v1538, 257
          %vm1795 = vcmp.lt.s32.totalorder %v1539, 257
          %vm1796 = vcmp.lt.s32.totalorder %v1540, 257
          %vm1797 = vcmp.lt.s32.totalorder %v1541, 257
          %vm1798 = vcmp.lt.s32.totalorder %v1542, 257
          %vm1799 = vcmp.lt.s32.totalorder %v1543, 257
          %vm1800 = vcmp.lt.s32.totalorder %v1544, 257
          %vm1801 = vcmp.lt.s32.totalorder %v1545, 257
          %vm1802 = vcmp.lt.s32.totalorder %v1546, 257
          %vm1803 = vcmp.lt.s32.totalorder %v1547, 257
          %vm1804 = vcmp.lt.s32.totalorder %v1548, 257
          %vm1805 = vcmp.lt.s32.totalorder %v1549, 257
          %vm1806 = vcmp.lt.s32.totalorder %v1550, 257
          %vm1807 = vcmp.lt.s32.totalorder %v1551, 257
          %vm1808 = vcmp.lt.s32.totalorder %v1552, 257
          %vm1809 = vcmp.lt.s32.totalorder %v1553, 257
          %vm1810 = vcmp.lt.s32.totalorder %v1554, 257
          %vm1811 = vcmp.lt.s32.totalorder %v1555, 257
          %vm1812 = vcmp.lt.s32.totalorder %v1556, 257
          %vm1813 = vcmp.lt.s32.totalorder %v1557, 257
          %vm1814 = vcmp.lt.s32.totalorder %v1558, 257
          %vm1815 = vcmp.lt.s32.totalorder %v1559, 257
          %vm1816 = vcmp.lt.s32.totalorder %v1560, 257
          %vm1817 = vcmp.lt.s32.totalorder %v1561, 257
          %vm1818 = vcmp.lt.s32.totalorder %v1562, 257
          %vm1819 = vcmp.lt.s32.totalorder %v1563, 257
          %vm1820 = vcmp.lt.s32.totalorder %v1564, 257
          %vm1821 = vcmp.lt.s32.totalorder %v1565, 257
          %vm1822 = vcmp.lt.s32.totalorder %v1566, 257
          %vm1823 = vcmp.lt.s32.totalorder %v1567, 257
          %vm1824 = vcmp.lt.s32.totalorder %v1568, 257
          %vm1825 = vcmp.lt.s32.totalorder %v1569, 257
          %vm1826 = vcmp.lt.s32.totalorder %v1570, 257
          %vm1827 = vcmp.lt.s32.totalorder %v1571, 257
          %vm1828 = vcmp.lt.s32.totalorder %v1572, 257
          %vm1829 = vcmp.lt.s32.totalorder %v1573, 257
          %vm1830 = vcmp.lt.s32.totalorder %v1574, 257
          %vm1831 = vcmp.lt.s32.totalorder %v1575, 257
          %vm1832 = vcmp.lt.s32.totalorder %v1576, 257
          %vm1833 = vcmp.lt.s32.totalorder %v1577, 257
          %vm1834 = vcmp.lt.s32.totalorder %v1578, 257
          %vm1835 = vcmp.lt.s32.totalorder %v1579, 257
          %vm1836 = vcmp.lt.s32.totalorder %v1580, 257
          %vm1837 = vcmp.lt.s32.totalorder %v1581, 257
          %vm1838 = vcmp.lt.s32.totalorder %v1582, 257
          %vm1839 = vcmp.lt.s32.totalorder %v1583, 257
          %vm1840 = vcmp.lt.s32.totalorder %v1584, 257
          %vm1841 = vcmp.lt.s32.totalorder %v1585, 257
          %vm1842 = vcmp.lt.s32.totalorder %v1586, 257
          %vm1843 = vcmp.lt.s32.totalorder %v1587, 257
          %vm1844 = vcmp.lt.s32.totalorder %v1588, 257
          %vm1845 = vcmp.lt.s32.totalorder %v1589, 257
          %vm1846 = vcmp.lt.s32.totalorder %v1590, 257
          %vm1847 = vcmp.lt.s32.totalorder %v1591, 257
          %vm1848 = vcmp.lt.s32.totalorder %v1592, 257
          %vm1849 = vcmp.lt.s32.totalorder %v1593, 257
          %vm1850 = vcmp.lt.s32.totalorder %v1594, 257
          %vm1851 = vcmp.lt.s32.totalorder %v1595, 257
          %vm1852 = vcmp.lt.s32.totalorder %v1596, 257
          %vm1853 = vcmp.lt.s32.totalorder %v1597, 257
          %vm1854 = vcmp.lt.s32.totalorder %v1598, 257
          %vm1855 = vcmp.lt.s32.totalorder %v1599, 257
          %vm1856 = vcmp.lt.s32.totalorder %v1600, 257
          %vm1857 = vcmp.lt.s32.totalorder %v1601, 257
          %vm1858 = vcmp.lt.s32.totalorder %v1602, 257
          %vm1859 = vcmp.lt.s32.totalorder %v1603, 257
          %vm1860 = vcmp.lt.s32.totalorder %v1604, 257
          %vm1861 = vcmp.lt.s32.totalorder %v1605, 257
          %vm1862 = vcmp.lt.s32.totalorder %v1606, 257
          %vm1863 = vcmp.lt.s32.totalorder %v1607, 257
          %vm1864 = vcmp.lt.s32.totalorder %v1608, 257
          %vm1865 = vcmp.lt.s32.totalorder %v1609, 257
          %vm1866 = vcmp.lt.s32.totalorder %v1610, 257
          %vm1867 = vcmp.lt.s32.totalorder %v1611, 257
          %vm1868 = vcmp.lt.s32.totalorder %v1612, 257
          %vm1869 = vcmp.lt.s32.totalorder %v1613, 257
          %vm1870 = vcmp.lt.s32.totalorder %v1614, 257
          %vm1871 = vcmp.lt.s32.totalorder %v1615, 257
          %vm1872 = vcmp.lt.s32.totalorder %v1616, 257
          %vm1873 = vcmp.lt.s32.totalorder %v1617, 257
          %vm1874 = vcmp.lt.s32.totalorder %v1618, 257
          %vm1875 = vcmp.lt.s32.totalorder %v1619, 257
          %vm1876 = vcmp.lt.s32.totalorder %v1620, 257
          %vm1877 = vcmp.lt.s32.totalorder %v1621, 257
          %vm1878 = vcmp.lt.s32.totalorder %v1622, 257
          %vm1879 = vcmp.lt.s32.totalorder %v1623, 257
          %vm1880 = vcmp.lt.s32.totalorder %v1624, 257
          %vm1881 = vcmp.lt.s32.totalorder %v1625, 257
          %vm1882 = vcmp.lt.s32.totalorder %v1626, 257
          %vm1883 = vcmp.lt.s32.totalorder %v1627, 257
          %vm1884 = vcmp.lt.s32.totalorder %v1628, 257
          %vm1885 = vcmp.lt.s32.totalorder %v1629, 257
          %vm1886 = vcmp.lt.s32.totalorder %v1630, 257
          %vm1887 = vcmp.lt.s32.totalorder %v1631, 257
          %vm1888 = vcmp.lt.s32.totalorder %v1632, 257
          %vm1889 = vcmp.lt.s32.totalorder %v1633, 257
          %vm1890 = vcmp.lt.s32.totalorder %v1634, 257
          %vm1891 = vcmp.lt.s32.totalorder %v1635, 257
          %vm1892 = vcmp.lt.s32.totalorder %v1636, 257
          %vm1893 = vcmp.lt.s32.totalorder %v1637, 257
          %vm1894 = vcmp.lt.s32.totalorder %v1638, 257
          %vm1895 = vcmp.lt.s32.totalorder %v1639, 257
          %vm1896 = vcmp.lt.s32.totalorder %v1640, 257
          %vm1897 = vcmp.lt.s32.totalorder %v1641, 257
          %vm1898 = vcmp.lt.s32.totalorder %v1642, 257
          %vm1899 = vcmp.lt.s32.totalorder %v1643, 257
          %vm1900 = vcmp.lt.s32.totalorder %v1644, 257
          %vm1901 = vcmp.lt.s32.totalorder %v1645, 257
          %vm1902 = vcmp.lt.s32.totalorder %v1646, 257
          %vm1903 = vcmp.lt.s32.totalorder %v1647, 257
          %vm1904 = vcmp.lt.s32.totalorder %v1648, 257
          %vm1905 = vcmp.lt.s32.totalorder %v1649, 257
          %vm1906 = vcmp.lt.s32.totalorder %v1650, 257
          %vm1907 = vcmp.lt.s32.totalorder %v1651, 257
          %vm1908 = vcmp.lt.s32.totalorder %v1652, 257
          %vm1909 = vcmp.lt.s32.totalorder %v1653, 257
          %vm1910 = vcmp.lt.s32.totalorder %v1654, 257
          %vm1911 = vcmp.lt.s32.totalorder %v1655, 257
          %vm1912 = vcmp.lt.s32.totalorder %v1656, 257
          %vm1913 = vcmp.lt.s32.totalorder %v1657, 257
          %vm1914 = vcmp.lt.s32.totalorder %v1658, 257
          %vm1915 = vcmp.lt.s32.totalorder %v1659, 257
          %vm1916 = vcmp.lt.s32.totalorder %v1660, 257
          %vm1917 = vcmp.lt.s32.totalorder %v1661, 257
          %vm1918 = vcmp.lt.s32.totalorder %v1662, 257
          %vm1919 = vcmp.lt.s32.totalorder %v1663, 257
          %vm1920 = vcmp.lt.s32.totalorder %v1664, 257
          %vm1921 = vcmp.lt.s32.totalorder %v1665, 257
          %vm1922 = vcmp.lt.s32.totalorder %v1666, 257
          %vm1923 = vcmp.lt.s32.totalorder %v1667, 257
          %vm1924 = vcmp.lt.s32.totalorder %v1668, 257
          %vm1925 = vcmp.lt.s32.totalorder %v1669, 257
          %vm1926 = vcmp.lt.s32.totalorder %v1670, 257
          %vm1927 = vcmp.lt.s32.totalorder %v1671, 257
          %vm1928 = vcmp.lt.s32.totalorder %v1672, 257
          %vm1929 = vcmp.lt.s32.totalorder %v1673, 257
          %vm1930 = vcmp.lt.s32.totalorder %v1674, 257
          %vm1931 = vcmp.lt.s32.totalorder %v1675, 257
          %vm1932 = vcmp.lt.s32.totalorder %v1676, 257
          %vm1933 = vcmp.lt.s32.totalorder %v1677, 257
          %vm1934 = vcmp.lt.s32.totalorder %v1678, 257
          %vm1935 = vcmp.lt.s32.totalorder %v1679, 257
          %vm1936 = vcmp.lt.s32.totalorder %v1680, 257
          %vm1937 = vcmp.lt.s32.totalorder %v1681, 257
          %vm1938 = vcmp.lt.s32.totalorder %v1682, 257
          %vm1939 = vcmp.lt.s32.totalorder %v1683, 257
          %vm1940 = vcmp.lt.s32.totalorder %v1684, 257
          %vm1941 = vcmp.lt.s32.totalorder %v1685, 257
          %vm1942 = vcmp.lt.s32.totalorder %v1686, 257
          %vm1943 = vcmp.lt.s32.totalorder %v1687, 257
          %vm1944 = vcmp.lt.s32.totalorder %v1688, 257
          %vm1945 = vcmp.lt.s32.totalorder %v1689, 257
          %vm1946 = vcmp.lt.s32.totalorder %v1690, 257
          %vm1947 = vcmp.lt.s32.totalorder %v1691, 257
          %vm1948 = vcmp.lt.s32.totalorder %v1692, 257
          %vm1949 = vcmp.lt.s32.totalorder %v1693, 257
          %vm1950 = vcmp.lt.s32.totalorder %v1694, 257
          %vm1951 = vcmp.lt.s32.totalorder %v1695, 257
          %vm1952 = vcmp.lt.s32.totalorder %v1696, 257
          %vm1953 = vcmp.lt.s32.totalorder %v1697, 257
          %vm1954 = vcmp.lt.s32.totalorder %v1698, 257
          %vm1955 = vcmp.lt.s32.totalorder %v1699, 257
          %vm1956 = vcmp.lt.s32.totalorder %v1700, 257
          %vm1957 = vcmp.lt.s32.totalorder %v1701, 257
          %vm1958 = vcmp.lt.s32.totalorder %v1702, 257
          %vm1959 = vcmp.lt.s32.totalorder %v1703, 257
          %vm1960 = vcmp.lt.s32.totalorder %v1704, 257
          %vm1961 = vcmp.lt.s32.totalorder %v1705, 257
          %vm1962 = vcmp.lt.s32.totalorder %v1706, 257
          %vm1963 = vcmp.lt.s32.totalorder %v1707, 257
          %vm1964 = vcmp.lt.s32.totalorder %v1708, 257
          %vm1965 = vcmp.lt.s32.totalorder %v1709, 257
          %vm1966 = vcmp.lt.s32.totalorder %v1710, 257
          %vm1967 = vcmp.lt.s32.totalorder %v1711, 257
          %vm1968 = vcmp.lt.s32.totalorder %v1712, 257
          %vm1969 = vcmp.lt.s32.totalorder %v1713, 257
          %vm1970 = vcmp.lt.s32.totalorder %v1714, 257
          %vm1971 = vcmp.lt.s32.totalorder %v1715, 257
          %vm1972 = vcmp.lt.s32.totalorder %v1716, 257
          %vm1973 = vcmp.lt.s32.totalorder %v1717, 257
          %vm1974 = vcmp.lt.s32.totalorder %v1718, 257
          %vm1975 = vcmp.lt.s32.totalorder %v1719, 257
          %vm1976 = vcmp.lt.s32.totalorder %v1720, 257
          %vm1977 = vcmp.lt.s32.totalorder %v1721, 257
          %vm1978 = vcmp.lt.s32.totalorder %v1722, 257
          %vm1979 = vcmp.lt.s32.totalorder %v1723, 257
          %vm1980 = vcmp.lt.s32.totalorder %v1724, 257
          %vm1981 = vcmp.lt.s32.totalorder %v1725, 257
          %vm1982 = vcmp.lt.s32.totalorder %v1726, 257
          %vm1983 = vcmp.lt.s32.totalorder %v1727, 257
          %vm1984 = vcmp.lt.s32.totalorder %v1728, 257
          %vm1985 = vcmp.lt.s32.totalorder %v1729, 257
          %vm1986 = vcmp.lt.s32.totalorder %v1730, 257
          %vm1987 = vcmp.lt.s32.totalorder %v1731, 257
          %vm1988 = vcmp.lt.s32.totalorder %v1732, 257
          %vm1989 = vcmp.lt.s32.totalorder %v1733, 257
          %vm1990 = vcmp.lt.s32.totalorder %v1734, 257
          %vm1991 = vcmp.lt.s32.totalorder %v1735, 257
          %vm1992 = vcmp.lt.s32.totalorder %v1736, 257
          %vm1993 = vcmp.lt.s32.totalorder %v1737, 257
          %vm1994 = vcmp.lt.s32.totalorder %v1738, 257
          %vm1995 = vcmp.lt.s32.totalorder %v1739, 257
          %vm1996 = vcmp.lt.s32.totalorder %v1740, 257
          %vm1997 = vcmp.lt.s32.totalorder %v1741, 257
          %vm1998 = vcmp.lt.s32.totalorder %v1742, 257
          %vm1999 = vcmp.lt.s32.totalorder %v1743, 257
          %vm2000 = vcmp.lt.s32.totalorder %v1744, 257
          %vm2001 = vcmp.lt.s32.totalorder %v1745, 257
          %vm2002 = vcmp.lt.s32.totalorder %v1746, 257
          %vm2003 = vcmp.lt.s32.totalorder %v1747, 257
          %vm2004 = vcmp.lt.s32.totalorder %v1748, 257
          %vm2005 = vcmp.lt.s32.totalorder %v1749, 257
          %vm2006 = vcmp.lt.s32.totalorder %v1750, 257
          %vm2007 = vcmp.lt.s32.totalorder %v1751, 257
          %vm2008 = vcmp.lt.s32.totalorder %v1752, 257
          %vm2009 = vcmp.lt.s32.totalorder %v1753, 257
          %vm2010 = vcmp.lt.s32.totalorder %v1754, 257
          %vm2011 = vcmp.lt.s32.totalorder %v1755, 257
          %vm2012 = vcmp.lt.s32.totalorder %v1756, 257
          %vm2013 = vcmp.lt.s32.totalorder %v1757, 257
          %vm2014 = vcmp.lt.s32.totalorder %v1758, 257
          %vm2015 = vcmp.lt.s32.totalorder %v1759, 257
          %vm2016 = vcmp.lt.s32.totalorder %v1760, 257
          %vm2017 = vcmp.lt.s32.totalorder %v1761, 257
          %vm2018 = vcmp.lt.s32.totalorder %v1762, 257
          %vm2019 = vcmp.lt.s32.totalorder %v1763, 257
          %vm2020 = vcmp.lt.s32.totalorder %v1764, 257
          %vm2021 = vcmp.lt.s32.totalorder %v1765, 257
          %vm2022 = vcmp.lt.s32.totalorder %v1766, 257
          %vm2023 = vcmp.lt.s32.totalorder %v1767, 257
          %vm2024 = vcmp.lt.s32.totalorder %v1768, 257
          %vm2025 = vcmp.lt.s32.totalorder %v1769, 257
          %vm2026 = vcmp.lt.s32.totalorder %v1770, 257
          %vm2027 = vcmp.lt.s32.totalorder %v1771, 257
          %vm2028 = vcmp.lt.s32.totalorder %v1772, 257
          %vm2029 = vcmp.lt.s32.totalorder %v1773, 257
          %vm2030 = vcmp.lt.s32.totalorder %v1774, 257
          %vm2031 = vcmp.lt.s32.totalorder %v1775, 257
          %vm2032 = vcmp.lt.s32.totalorder %v1776, 257
          %vm2033 = vcmp.lt.s32.totalorder %v1777, 257
          %vm2034 = vcmp.lt.s32.totalorder %v1778, 257
          %vm2035 = vcmp.lt.s32.totalorder %v1779, 257
          %vm2036 = vcmp.lt.s32.totalorder %v1780, 257
          %vm2037 = vcmp.lt.s32.totalorder %v1781, 257
          %vm2038 = vcmp.lt.s32.totalorder %v1782, 257
          %v2039 = vld [vmem:[#allocation2] sm:$0xff]
          %v2040 = vsel %vm1783, %v1004, 0.0
          %v2041 = vsel %vm1784, %v1005, 0.0
          %v2042 = vsel %vm1785, %v1006, 0.0
          %v2043 = vsel %vm1786, %v1007, 0.0
          %v2044 = vsel %vm1787, %v1008, 0.0
          %v2045 = vsel %vm1788, %v1009, 0.0
          %v2046 = vsel %vm1789, %v1010, 0.0
          %v2047 = vsel %vm1790, %v1011, 0.0
          %v2048 = vsel %vm1791, %v1012, 0.0
          %v2049 = vsel %vm1792, %v1013, 0.0
          %v2050 = vsel %vm1793, %v1014, 0.0
          %v2051 = vsel %vm1794, %v1015, 0.0
          %v2052 = vsel %vm1795, %v1016, 0.0
          %v2053 = vsel %vm1796, %v1017, 0.0
          %v2054 = vsel %vm1797, %v1018, 0.0
          %v2055 = vsel %vm1798, %v1019, 0.0
          %v2056 = vsel %vm1799, %v1020, 0.0
          %v2057 = vsel %vm1800, %v1021, 0.0
          %v2058 = vsel %vm1801, %v1022, 0.0
          %v2059 = vsel %vm1802, %v1023, 0.0
          %v2060 = vsel %vm1803, %v1024, 0.0
          %v2061 = vsel %vm1804, %v1025, 0.0
          %v2062 = vsel %vm1805, %v1026, 0.0
          %v2063 = vsel %vm1806, %v1027, 0.0
          %v2064 = vsel %vm1807, %v1028, 0.0
          %v2065 = vsel %vm1808, %v1029, 0.0
          %v2066 = vsel %vm1809, %v1030, 0.0
          %v2067 = vsel %vm1810, %v1031, 0.0
          %v2068 = vsel %vm1811, %v1032, 0.0
          %v2069 = vsel %vm1812, %v1033, 0.0
          %v2070 = vsel %vm1813, %v1034, 0.0
          %v2071 = vsel %vm1814, %v1035, 0.0
          %v2072 = vsel %vm1815, %v1036, 0.0
          %v2073 = vsel %vm1816, %v1037, 0.0
          %v2074 = vsel %vm1817, %v1038, 0.0
          %v2075 = vsel %vm1818, %v1039, 0.0
          %v2076 = vsel %vm1819, %v1040, 0.0
          %v2077 = vsel %vm1820, %v1041, 0.0
          %v2078 = vsel %vm1821, %v1042, 0.0
          %v2079 = vsel %vm1822, %v1043, 0.0
          %v2080 = vsel %vm1823, %v1044, 0.0
          %v2081 = vsel %vm1824, %v1045, 0.0
          %v2082 = vsel %vm1825, %v1046, 0.0
          %v2083 = vsel %vm1826, %v1047, 0.0
          %v2084 = vsel %vm1827, %v1048, 0.0
          %v2085 = vsel %vm1828, %v1049, 0.0
          %v2086 = vsel %vm1829, %v1050, 0.0
          %v2087 = vsel %vm1830, %v1051, 0.0
          %v2088 = vsel %vm1831, %v1052, 0.0
          %v2089 = vsel %vm1832, %v1053, 0.0
          %v2090 = vsel %vm1833, %v1054, 0.0
          %v2091 = vsel %vm1834, %v1055, 0.0
          %v2092 = vsel %vm1835, %v1056, 0.0
          %v2093 = vsel %vm1836, %v1057, 0.0
          %v2094 = vsel %vm1837, %v1058, 0.0
          %v2095 = vsel %vm1838, %v1059, 0.0
          %v2096 = vsel %vm1839, %v1060, 0.0
          %v2097 = vsel %vm1840, %v1061, 0.0
          %v2098 = vsel %vm1841, %v1062, 0.0
          %v2099 = vsel %vm1842, %v1063, 0.0
          %v2100 = vsel %vm1843, %v1064, 0.0
          %v2101 = vsel %vm1844, %v1065, 0.0
          %v2102 = vsel %vm1845, %v1066, 0.0
          %v2103 = vsel %vm1846, %v1067, 0.0
          %v2104 = vsel %vm1847, %v1068, 0.0
          %v2105 = vsel %vm1848, %v1069, 0.0
          %v2106 = vsel %vm1849, %v1070, 0.0
          %v2107 = vsel %vm1850, %v1071, 0.0
          %v2108 = vsel %vm1851, %v1072, 0.0
          %v2109 = vsel %vm1852, %v1073, 0.0
          %v2110 = vsel %vm1853, %v1074, 0.0
          %v2111 = vsel %vm1854, %v1075, 0.0
          %v2112 = vsel %vm1855, %v1076, 0.0
          %v2113 = vsel %vm1856, %v1077, 0.0
          %v2114 = vsel %vm1857, %v1078, 0.0
          %v2115 = vsel %vm1858, %v1079, 0.0
          %v2116 = vsel %vm1859, %v1080, 0.0
          %v2117 = vsel %vm1860, %v1081, 0.0
          %v2118 = vsel %vm1861, %v1082, 0.0
          %v2119 = vsel %vm1862, %v1083, 0.0
          %v2120 = vsel %vm1863, %v1084, 0.0
          %v2121 = vsel %vm1864, %v1085, 0.0
          %v2122 = vsel %vm1865, %v1086, 0.0
          %v2123 = vsel %vm1866, %v1087, 0.0
          %v2124 = vsel %vm1867, %v1088, 0.0
          %v2125 = vsel %vm1868, %v1089, 0.0
          %v2126 = vsel %vm1869, %v1090, 0.0
          %v2127 = vsel %vm1870, %v1091, 0.0
          %v2128 = vsel %vm1871, %v1092, 0.0
          %v2129 = vsel %vm1872, %v1093, 0.0
          %v2130 = vsel %vm1873, %v1094, 0.0
          %v2131 = vsel %vm1874, %v1095, 0.0
          %v2132 = vsel %vm1875, %v1096, 0.0
          %v2133 = vsel %vm1876, %v1097, 0.0
          %v2134 = vsel %vm1877, %v1098, 0.0
          %v2135 = vsel %vm1878, %v1099, 0.0
          %v2136 = vsel %vm1879, %v1100, 0.0
          %v2137 = vsel %vm1880, %v1101, 0.0
          %v2138 = vsel %vm1881, %v1102, 0.0
          %v2139 = vsel %vm1882, %v1103, 0.0
          %v2140 = vsel %vm1883, %v1104, 0.0
          %v2141 = vsel %vm1884, %v1105, 0.0
          %v2142 = vsel %vm1885, %v1106, 0.0
          %v2143 = vsel %vm1886, %v1107, 0.0
          %v2144 = vsel %vm1887, %v1108, 0.0
          %v2145 = vsel %vm1888, %v1109, 0.0
          %v2146 = vsel %vm1889, %v1110, 0.0
          %v2147 = vsel %vm1890, %v1111, 0.0
          %v2148 = vsel %vm1891, %v1112, 0.0
          %v2149 = vsel %vm1892, %v1113, 0.0
          %v2150 = vsel %vm1893, %v1114, 0.0
          %v2151 = vsel %vm1894, %v1115, 0.0
          %v2152 = vsel %vm1895, %v1116, 0.0
          %v2153 = vsel %vm1896, %v1117, 0.0
          %v2154 = vsel %vm1897, %v1118, 0.0
          %v2155 = vsel %vm1898, %v1119, 0.0
          %v2156 = vsel %vm1899, %v1120, 0.0
          %v2157 = vsel %vm1900, %v1121, 0.0
          %v2158 = vsel %vm1901, %v1122, 0.0
          %v2159 = vsel %vm1902, %v1123, 0.0
          %v2160 = vsel %vm1903, %v1124, 0.0
          %v2161 = vsel %vm1904, %v1125, 0.0
          %v2162 = vsel %vm1905, %v1126, 0.0
          %v2163 = vsel %vm1906, %v1127, 0.0
          %v2164 = vsel %vm1907, %v1128, 0.0
          %v2165 = vsel %vm1908, %v1129, 0.0
          %v2166 = vsel %vm1909, %v1130, 0.0
          %v2167 = vsel %vm1910, %v1131, 0.0
          %v2168 = vsel %vm1911, %v1132, 0.0
          %v2169 = vsel %vm1912, %v1133, 0.0
          %v2170 = vsel %vm1913, %v1134, 0.0
          %v2171 = vsel %vm1914, %v1135, 0.0
          %v2172 = vsel %vm1915, %v1136, 0.0
          %v2173 = vsel %vm1916, %v1137, 0.0
          %v2174 = vsel %vm1917, %v1138, 0.0
          %v2175 = vsel %vm1918, %v1139, 0.0
          %v2176 = vsel %vm1919, %v1140, 0.0
          %v2177 = vsel %vm1920, %v1141, 0.0
          %v2178 = vsel %vm1921, %v1142, 0.0
          %v2179 = vsel %vm1922, %v1143, 0.0
          %v2180 = vsel %vm1923, %v1144, 0.0
          %v2181 = vsel %vm1924, %v1145, 0.0
          %v2182 = vsel %vm1925, %v1146, 0.0
          %v2183 = vsel %vm1926, %v1147, 0.0
          %v2184 = vsel %vm1927, %v1148, 0.0
          %v2185 = vsel %vm1928, %v1149, 0.0
          %v2186 = vsel %vm1929, %v1150, 0.0
          %v2187 = vsel %vm1930, %v1151, 0.0
          %v2188 = vsel %vm1931, %v1152, 0.0
          %v2189 = vsel %vm1932, %v1153, 0.0
          %v2190 = vsel %vm1933, %v1154, 0.0
          %v2191 = vsel %vm1934, %v1155, 0.0
          %v2192 = vsel %vm1935, %v1156, 0.0
          %v2193 = vsel %vm1936, %v1157, 0.0
          %v2194 = vsel %vm1937, %v1158, 0.0
          %v2195 = vsel %vm1938, %v1159, 0.0
          %v2196 = vsel %vm1939, %v1160, 0.0
          %v2197 = vsel %vm1940, %v1161, 0.0
          %v2198 = vsel %vm1941, %v1162, 0.0
          %v2199 = vsel %vm1942, %v1163, 0.0
          %v2200 = vsel %vm1943, %v1164, 0.0
          %v2201 = vsel %vm1944, %v1165, 0.0
          %v2202 = vsel %vm1945, %v1166, 0.0
          %v2203 = vsel %vm1946, %v1167, 0.0
          %v2204 = vsel %vm1947, %v1168, 0.0
          %v2205 = vsel %vm1948, %v1169, 0.0
          %v2206 = vsel %vm1949, %v1170, 0.0
          %v2207 = vsel %vm1950, %v1171, 0.0
          %v2208 = vsel %vm1951, %v1172, 0.0
          %v2209 = vsel %vm1952, %v1173, 0.0
          %v2210 = vsel %vm1953, %v1174, 0.0
          %v2211 = vsel %vm1954, %v1175, 0.0
          %v2212 = vsel %vm1955, %v1176, 0.0
          %v2213 = vsel %vm1956, %v1177, 0.0
          %v2214 = vsel %vm1957, %v1178, 0.0
          %v2215 = vsel %vm1958, %v1179, 0.0
          %v2216 = vsel %vm1959, %v1180, 0.0
          %v2217 = vsel %vm1960, %v1181, 0.0
          %v2218 = vsel %vm1961, %v1182, 0.0
          %v2219 = vsel %vm1962, %v1183, 0.0
          %v2220 = vsel %vm1963, %v1184, 0.0
          %v2221 = vsel %vm1964, %v1185, 0.0
          %v2222 = vsel %vm1965, %v1186, 0.0
          %v2223 = vsel %vm1966, %v1187, 0.0
          %v2224 = vsel %vm1967, %v1188, 0.0
          %v2225 = vsel %vm1968, %v1189, 0.0
          %v2226 = vsel %vm1969, %v1190, 0.0
          %v2227 = vsel %vm1970, %v1191, 0.0
          %v2228 = vsel %vm1971, %v1192, 0.0
          %v2229 = vsel %vm1972, %v1193, 0.0
          %v2230 = vsel %vm1973, %v1194, 0.0
          %v2231 = vsel %vm1974, %v1195, 0.0
          %v2232 = vsel %vm1975, %v1196, 0.0
          %v2233 = vsel %vm1976, %v1197, 0.0
          %v2234 = vsel %vm1977, %v1198, 0.0
          %v2235 = vsel %vm1978, %v1199, 0.0
          %v2236 = vsel %vm1979, %v1200, 0.0
          %v2237 = vsel %vm1980, %v1201, 0.0
          %v2238 = vsel %vm1981, %v1202, 0.0
          %v2239 = vsel %vm1982, %v1203, 0.0
          %v2240 = vsel %vm1983, %v1204, 0.0
          %v2241 = vsel %vm1984, %v1205, 0.0
          %v2242 = vsel %vm1985, %v1206, 0.0
          %v2243 = vsel %vm1986, %v1207, 0.0
          %v2244 = vsel %vm1987, %v1208, 0.0
          %v2245 = vsel %vm1988, %v1209, 0.0
          %v2246 = vsel %vm1989, %v1210, 0.0
          %v2247 = vsel %vm1990, %v1211, 0.0
          %v2248 = vsel %vm1991, %v1212, 0.0
          %v2249 = vsel %vm1992, %v1213, 0.0
          %v2250 = vsel %vm1993, %v1214, 0.0
          %v2251 = vsel %vm1994, %v1215, 0.0
          %v2252 = vsel %vm1995, %v1216, 0.0
          %v2253 = vsel %vm1996, %v1217, 0.0
          %v2254 = vsel %vm1997, %v1218, 0.0
          %v2255 = vsel %vm1998, %v1219, 0.0
          %v2256 = vsel %vm1999, %v1220, 0.0
          %v2257 = vsel %vm2000, %v1221, 0.0
          %v2258 = vsel %vm2001, %v1222, 0.0
          %v2259 = vsel %vm2002, %v1223, 0.0
          %v2260 = vsel %vm2003, %v1224, 0.0
          %v2261 = vsel %vm2004, %v1225, 0.0
          %v2262 = vsel %vm2005, %v1226, 0.0
          %v2263 = vsel %vm2006, %v1227, 0.0
          %v2264 = vsel %vm2007, %v1228, 0.0
          %v2265 = vsel %vm2008, %v1229, 0.0
          %v2266 = vsel %vm2009, %v1230, 0.0
          %v2267 = vsel %vm2010, %v1231, 0.0
          %v2268 = vsel %vm2011, %v1232, 0.0
          %v2269 = vsel %vm2012, %v1233, 0.0
          %v2270 = vsel %vm2013, %v1234, 0.0
          %v2271 = vsel %vm2014, %v1235, 0.0
          %v2272 = vsel %vm2015, %v1236, 0.0
          %v2273 = vsel %vm2016, %v1237, 0.0
          %v2274 = vsel %vm2017, %v1238, 0.0
          %v2275 = vsel %vm2018, %v1239, 0.0
          %v2276 = vsel %vm2019, %v1240, 0.0
          %v2277 = vsel %vm2020, %v1241, 0.0
          %v2278 = vsel %vm2021, %v1242, 0.0
          %v2279 = vsel %vm2022, %v1243, 0.0
          %v2280 = vsel %vm2023, %v1244, 0.0
          %v2281 = vsel %vm2024, %v1245, 0.0
          %v2282 = vsel %vm2025, %v1246, 0.0
          %v2283 = vsel %vm2026, %v1247, 0.0
          %v2284 = vsel %vm2027, %v1248, 0.0
          %v2285 = vsel %vm2028, %v1249, 0.0
          %v2286 = vsel %vm2029, %v1250, 0.0
          %v2287 = vsel %vm2030, %v1251, 0.0
          %v2288 = vsel %vm2031, %v1252, 0.0
          %v2289 = vsel %vm2032, %v1253, 0.0
          %v2290 = vsel %vm2033, %v1254, 0.0
          %v2291 = vsel %vm2034, %v1255, 0.0
          %v2292 = vsel %vm2035, %v1256, 0.0
          %v2293 = vsel %vm2036, %v1257, 0.0
          %v2294 = vsel %vm2037, %v1258, 0.0
          %v2295 = vsel %vm2038, %v1259, 0.0
          %v2296 = vadd.f32 %v2040, %v2041
          %v2297 = vadd.f32 %v2296, %v2042
          %v2298 = vadd.f32 %v2297, %v2043
          %v2299 = vadd.f32 %v2298, %v2044
          %v2300 = vadd.f32 %v2299, %v2045
          %v2301 = vadd.f32 %v2300, %v2046
          %v2302 = vadd.f32 %v2301, %v2047
          %v2303 = vadd.f32 %v2302, %v2048
          %v2304 = vadd.f32 %v2303, %v2049
          %v2305 = vadd.f32 %v2304, %v2050
          %v2306 = vadd.f32 %v2305, %v2051
          %v2307 = vadd.f32 %v2306, %v2052
          %v2308 = vadd.f32 %v2307, %v2053
          %v2309 = vadd.f32 %v2308, %v2054
          %v2310 = vadd.f32 %v2309, %v2055
          %v2311 = vadd.f32 %v2310, %v2056
          %v2312 = vadd.f32 %v2311, %v2057
          %v2313 = vadd.f32 %v2312, %v2058
          %v2314 = vadd.f32 %v2313, %v2059
          %v2315 = vadd.f32 %v2314, %v2060
          %v2316 = vadd.f32 %v2315, %v2061
          %v2317 = vadd.f32 %v2316, %v2062
          %v2318 = vadd.f32 %v2317, %v2063
          %v2319 = vadd.f32 %v2318, %v2064
          %v2320 = vadd.f32 %v2319, %v2065
          %v2321 = vadd.f32 %v2320, %v2066
          %v2322 = vadd.f32 %v2321, %v2067
          %v2323 = vadd.f32 %v2322, %v2068
          %v2324 = vadd.f32 %v2323, %v2069
          %v2325 = vadd.f32 %v2324, %v2070
          %v2326 = vadd.f32 %v2325, %v2071
          %v2327 = vadd.f32 %v2326, %v2072
          %v2328 = vadd.f32 %v2327, %v2073
          %v2329 = vadd.f32 %v2328, %v2074
          %v2330 = vadd.f32 %v2329, %v2075
          %v2331 = vadd.f32 %v2330, %v2076
          %v2332 = vadd.f32 %v2331, %v2077
          %v2333 = vadd.f32 %v2332, %v2078
          %v2334 = vadd.f32 %v2333, %v2079
          %v2335 = vadd.f32 %v2334, %v2080
          %v2336 = vadd.f32 %v2335, %v2081
          %v2337 = vadd.f32 %v2336, %v2082
          %v2338 = vadd.f32 %v2337, %v2083
          %v2339 = vadd.f32 %v2338, %v2084
          %v2340 = vadd.f32 %v2339, %v2085
          %v2341 = vadd.f32 %v2340, %v2086
          %v2342 = vadd.f32 %v2341, %v2087
          %v2343 = vadd.f32 %v2342, %v2088
          %v2344 = vadd.f32 %v2343, %v2089
          %v2345 = vadd.f32 %v2344, %v2090
          %v2346 = vadd.f32 %v2345, %v2091
          %v2347 = vadd.f32 %v2346, %v2092
          %v2348 = vadd.f32 %v2347, %v2093
          %v2349 = vadd.f32 %v2348, %v2094
          %v2350 = vadd.f32 %v2349, %v2095
          %v2351 = vadd.f32 %v2350, %v2096
          %v2352 = vadd.f32 %v2351, %v2097
          %v2353 = vadd.f32 %v2352, %v2098
          %v2354 = vadd.f32 %v2353, %v2099
          %v2355 = vadd.f32 %v2354, %v2100
          %v2356 = vadd.f32 %v2355, %v2101
          %v2357 = vadd.f32 %v2356, %v2102
          %v2358 = vadd.f32 %v2357, %v2103
          %v2359 = vadd.f32 %v2358, %v2104
          %v2360 = vadd.f32 %v2359, %v2105
          %v2361 = vadd.f32 %v2360, %v2106
          %v2362 = vadd.f32 %v2361, %v2107
          %v2363 = vadd.f32 %v2362, %v2108
          %v2364 = vadd.f32 %v2363, %v2109
          %v2365 = vadd.f32 %v2364, %v2110
          %v2366 = vadd.f32 %v2365, %v2111
          %v2367 = vadd.f32 %v2366, %v2112
          %v2368 = vadd.f32 %v2367, %v2113
          %v2369 = vadd.f32 %v2368, %v2114
          %v2370 = vadd.f32 %v2369, %v2115
          %v2371 = vadd.f32 %v2370, %v2116
          %v2372 = vadd.f32 %v2371, %v2117
          %v2373 = vadd.f32 %v2372, %v2118
          %v2374 = vadd.f32 %v2373, %v2119
          %v2375 = vadd.f32 %v2374, %v2120
          %v2376 = vadd.f32 %v2375, %v2121
          %v2377 = vadd.f32 %v2376, %v2122
          %v2378 = vadd.f32 %v2377, %v2123
          %v2379 = vadd.f32 %v2378, %v2124
          %v2380 = vadd.f32 %v2379, %v2125
          %v2381 = vadd.f32 %v2380, %v2126
          %v2382 = vadd.f32 %v2381, %v2127
          %v2383 = vadd.f32 %v2382, %v2128
          %v2384 = vadd.f32 %v2383, %v2129
          %v2385 = vadd.f32 %v2384, %v2130
          %v2386 = vadd.f32 %v2385, %v2131
          %v2387 = vadd.f32 %v2386, %v2132
          %v2388 = vadd.f32 %v2387, %v2133
          %v2389 = vadd.f32 %v2388, %v2134
          %v2390 = vadd.f32 %v2389, %v2135
          %v2391 = vadd.f32 %v2390, %v2136
          %v2392 = vadd.f32 %v2391, %v2137
          %v2393 = vadd.f32 %v2392, %v2138
          %v2394 = vadd.f32 %v2393, %v2139
          %v2395 = vadd.f32 %v2394, %v2140
          %v2396 = vadd.f32 %v2395, %v2141
          %v2397 = vadd.f32 %v2396, %v2142
          %v2398 = vadd.f32 %v2397, %v2143
          %v2399 = vadd.f32 %v2398, %v2144
          %v2400 = vadd.f32 %v2399, %v2145
          %v2401 = vadd.f32 %v2400, %v2146
          %v2402 = vadd.f32 %v2401, %v2147
          %v2403 = vadd.f32 %v2402, %v2148
          %v2404 = vadd.f32 %v2403, %v2149
          %v2405 = vadd.f32 %v2404, %v2150
          %v2406 = vadd.f32 %v2405, %v2151
          %v2407 = vadd.f32 %v2406, %v2152
          %v2408 = vadd.f32 %v2407, %v2153
          %v2409 = vadd.f32 %v2408, %v2154
          %v2410 = vadd.f32 %v2409, %v2155
          %v2411 = vadd.f32 %v2410, %v2156
          %v2412 = vadd.f32 %v2411, %v2157
          %v2413 = vadd.f32 %v2412, %v2158
          %v2414 = vadd.f32 %v2413, %v2159
          %v2415 = vadd.f32 %v2414, %v2160
          %v2416 = vadd.f32 %v2415, %v2161
          %v2417 = vadd.f32 %v2416, %v2162
          %v2418 = vadd.f32 %v2417, %v2163
          %v2419 = vadd.f32 %v2418, %v2164
          %v2420 = vadd.f32 %v2419, %v2165
          %v2421 = vadd.f32 %v2420, %v2166
          %v2422 = vadd.f32 %v2421, %v2167
          %v2423 = vadd.f32 %v2422, %v2168
          %v2424 = vadd.f32 %v2423, %v2169
          %v2425 = vadd.f32 %v2424, %v2170
          %v2426 = vadd.f32 %v2425, %v2171
          %v2427 = vadd.f32 %v2426, %v2172
          %v2428 = vadd.f32 %v2427, %v2173
          %v2429 = vadd.f32 %v2428, %v2174
          %v2430 = vadd.f32 %v2429, %v2175
          %v2431 = vadd.f32 %v2430, %v2176
          %v2432 = vadd.f32 %v2431, %v2177
          %v2433 = vadd.f32 %v2432, %v2178
          %v2434 = vadd.f32 %v2433, %v2179
          %v2435 = vadd.f32 %v2434, %v2180
          %v2436 = vadd.f32 %v2435, %v2181
          %v2437 = vadd.f32 %v2436, %v2182
          %v2438 = vadd.f32 %v2437, %v2183
          %v2439 = vadd.f32 %v2438, %v2184
          %v2440 = vadd.f32 %v2439, %v2185
          %v2441 = vadd.f32 %v2440, %v2186
          %v2442 = vadd.f32 %v2441, %v2187
          %v2443 = vadd.f32 %v2442, %v2188
          %v2444 = vadd.f32 %v2443, %v2189
          %v2445 = vadd.f32 %v2444, %v2190
          %v2446 = vadd.f32 %v2445, %v2191
          %v2447 = vadd.f32 %v2446, %v2192
          %v2448 = vadd.f32 %v2447, %v2193
          %v2449 = vadd.f32 %v2448, %v2194
          %v2450 = vadd.f32 %v2449, %v2195
          %v2451 = vadd.f32 %v2450, %v2196
          %v2452 = vadd.f32 %v2451, %v2197
          %v2453 = vadd.f32 %v2452, %v2198
          %v2454 = vadd.f32 %v2453, %v2199
          %v2455 = vadd.f32 %v2454, %v2200
          %v2456 = vadd.f32 %v2455, %v2201
          %v2457 = vadd.f32 %v2456, %v2202
          %v2458 = vadd.f32 %v2457, %v2203
          %v2459 = vadd.f32 %v2458, %v2204
          %v2460 = vadd.f32 %v2459, %v2205
          %v2461 = vadd.f32 %v2460, %v2206
          %v2462 = vadd.f32 %v2461, %v2207
          %v2463 = vadd.f32 %v2462, %v2208
          %v2464 = vadd.f32 %v2463, %v2209
          %v2465 = vadd.f32 %v2464, %v2210
          %v2466 = vadd.f32 %v2465, %v2211
          %v2467 = vadd.f32 %v2466, %v2212
          %v2468 = vadd.f32 %v2467, %v2213
          %v2469 = vadd.f32 %v2468, %v2214
          %v2470 = vadd.f32 %v2469, %v2215
          %v2471 = vadd.f32 %v2470, %v2216
          %v2472 = vadd.f32 %v2471, %v2217
          %v2473 = vadd.f32 %v2472, %v2218
          %v2474 = vadd.f32 %v2473, %v2219
          %v2475 = vadd.f32 %v2474, %v2220
          %v2476 = vadd.f32 %v2475, %v2221
          %v2477 = vadd.f32 %v2476, %v2222
          %v2478 = vadd.f32 %v2477, %v2223
          %v2479 = vadd.f32 %v2478, %v2224
          %v2480 = vadd.f32 %v2479, %v2225
          %v2481 = vadd.f32 %v2480, %v2226
          %v2482 = vadd.f32 %v2481, %v2227
          %v2483 = vadd.f32 %v2482, %v2228
          %v2484 = vadd.f32 %v2483, %v2229
          %v2485 = vadd.f32 %v2484, %v2230
          %v2486 = vadd.f32 %v2485, %v2231
          %v2487 = vadd.f32 %v2486, %v2232
          %v2488 = vadd.f32 %v2487, %v2233
          %v2489 = vadd.f32 %v2488, %v2234
          %v2490 = vadd.f32 %v2489, %v2235
          %v2491 = vadd.f32 %v2490, %v2236
          %v2492 = vadd.f32 %v2491, %v2237
          %v2493 = vadd.f32 %v2492, %v2238
          %v2494 = vadd.f32 %v2493, %v2239
          %v2495 = vadd.f32 %v2494, %v2240
          %v2496 = vadd.f32 %v2495, %v2241
          %v2497 = vadd.f32 %v2496, %v2242
          %v2498 = vadd.f32 %v2497, %v2243
          %v2499 = vadd.f32 %v2498, %v2244
          %v2500 = vadd.f32 %v2499, %v2245
          %v2501 = vadd.f32 %v2500, %v2246
          %v2502 = vadd.f32 %v2501, %v2247
          %v2503 = vadd.f32 %v2502, %v2248
          %v2504 = vadd.f32 %v2503, %v2249
          %v2505 = vadd.f32 %v2504, %v2250
          %v2506 = vadd.f32 %v2505, %v2251
          %v2507 = vadd.f32 %v2506, %v2252
          %v2508 = vadd.f32 %v2507, %v2253
          %v2509 = vadd.f32 %v2508, %v2254
          %v2510 = vadd.f32 %v2509, %v2255
          %v2511 = vadd.f32 %v2510, %v2256
          %v2512 = vadd.f32 %v2511, %v2257
          %v2513 = vadd.f32 %v2512, %v2258
          %v2514 = vadd.f32 %v2513, %v2259
          %v2515 = vadd.f32 %v2514, %v2260
          %v2516 = vadd.f32 %v2515, %v2261
          %v2517 = vadd.f32 %v2516, %v2262
          %v2518 = vadd.f32 %v2517, %v2263
          %v2519 = vadd.f32 %v2518, %v2264
          %v2520 = vadd.f32 %v2519, %v2265
          %v2521 = vadd.f32 %v2520, %v2266
          %v2522 = vadd.f32 %v2521, %v2267
          %v2523 = vadd.f32 %v2522, %v2268
          %v2524 = vadd.f32 %v2523, %v2269
          %v2525 = vadd.f32 %v2524, %v2270
          %v2526 = vadd.f32 %v2525, %v2271
          %v2527 = vadd.f32 %v2526, %v2272
          %v2528 = vadd.f32 %v2527, %v2273
          %v2529 = vadd.f32 %v2528, %v2274
          %v2530 = vadd.f32 %v2529, %v2275
          %v2531 = vadd.f32 %v2530, %v2276
          %v2532 = vadd.f32 %v2531, %v2277
          %v2533 = vadd.f32 %v2532, %v2278
          %v2534 = vadd.f32 %v2533, %v2279
          %v2535 = vadd.f32 %v2534, %v2280
          %v2536 = vadd.f32 %v2535, %v2281
          %v2537 = vadd.f32 %v2536, %v2282
          %v2538 = vadd.f32 %v2537, %v2283
          %v2539 = vadd.f32 %v2538, %v2284
          %v2540 = vadd.f32 %v2539, %v2285
          %v2541 = vadd.f32 %v2540, %v2286
          %v2542 = vadd.f32 %v2541, %v2287
          %v2543 = vadd.f32 %v2542, %v2288
          %v2544 = vadd.f32 %v2543, %v2289
          %v2545 = vadd.f32 %v2544, %v2290
          %v2546 = vadd.f32 %v2545, %v2291
          %v2547 = vadd.f32 %v2546, %v2292
          %v2548 = vadd.f32 %v2547, %v2293
          %v2549 = vadd.f32 %v2548, %v2294
          %v2550 = vadd.f32 %v2549, %v2295
          %v2551 = vadd.f32 %v2039, %v2550
          %2552 = vst [vmem:[#allocation2] sm:$0xff] %v2551
        $region48: #{tpu_custom_call.1} parent=27 // pred_fallthru
          _
        %p2553 = scmp.eq.s32.totalorder %s25, 1
        // Predicated region
        $region49: #{tpu_custom_call.1} parent=27 // pred_check
          %p2554 = pneg %p2553
        $region50: #{tpu_custom_call.1} parent=27 // pred_check_branch
          %2556 = sbr.rel (%p2554) target = $region52
        $region51: #{tpu_custom_call.1} parent=27 // pred_region
          %v2557 = vld [vmem:[#allocation2] sm:$0xff]
          %2558 = vst [vmem:[#allocation8] sm:$0xff] %v2557
        $region52: #{tpu_custom_call.1} parent=27 // pred_fallthru
          _
        // Predicated region
        $region53: #{tpu_custom_call.1} parent=27 // pred_check
          %p2559 = pneg %p102
        $region54: #{tpu_custom_call.1} parent=27 // pred_check_branch
          %2561 = sbr.rel (%p2559) target = $region56
        $region55: #{tpu_custom_call.1} parent=27 // pred_region
          %s2563 = ssub.s32 128, 128
          %2564 = vsyncadd [#allocation5], %s2563
          %s2565 = smul.addr %s24, 128
          %s2566 = scalar_lea.hbm %s2, %s2565
          %s2568 = sshll.u32 [#allocation8], 4
          %s2569 = int_to_ptr.vmem [resolvable:$true] %s2568
          %2571 = dma.vmem_to_hbm [thread:$0]  %s2569, 128, %s2566, [#allocation5]
        $region56: #{tpu_custom_call.1} parent=27 // pred_fallthru
          _
        // Predicated region
        $region57: #{tpu_custom_call.1} parent=27 // pred_check
          %p2572 = pneg %p102
        $region58: #{tpu_custom_call.1} parent=27 // pred_check_branch
          %2574 = sbr.rel (%p2572) target = $region60
        $region59: #{tpu_custom_call.1} parent=27 // pred_region
          %2575 = dma.done [#allocation5], 128
        $region60: #{tpu_custom_call.1} parent=27 // pred_fallthru
          _
      $region28: #{tpu_custom_call.1} parent=5 // pred_fallthru
        _
      %p2576 = scmp.le.s32.totalorder 2, %s15
      // Predicated region
      $region61: #{tpu_custom_call.1} parent=5 // pred_check
        %p2577 = pneg %p2576
      $region62: #{tpu_custom_call.1} parent=5 // pred_check_branch
        %2579 = sbr.rel (%p2577) target = $region64
      $region63: #{tpu_custom_call.1} parent=5 // pred_region
        %s2580 = ssub.s32 %s15, 2
      $region64: #{tpu_custom_call.1} parent=5 // pred_fallthru
        _
    $region6: #{tpu_custom_call.1} parent=1 // loop_footer
      %s19 = sadd.s32 1, %s15
    $region7: #{tpu_custom_call.1} parent=1 // loop_footer_branch
      %14 = sbr.rel target = $region3
    $region8: #{tpu_custom_call.1} parent=1 // loop_exit
      _
    %2581 = vsyncpa [#allocation4], 1
    %s2582 = scalar_lea.sflag [#allocation4], 1
    %2583 = vsyncpa %s2582, 1
    %2584 = vsyncpa [#allocation7], 1
    %s2585 = scalar_lea.sflag [#allocation7], 1
    %2586 = vsyncpa %s2585, 1
    %2587 = vsyncpa [#allocation5], 1
    %s2588 = scalar_lea.sflag [#allocation5], 1
    %2589 = vsyncpa %s2588, 1

</llo_original>
